<compile_context>
chip_gen: v7x
topology: tpu7x:2x2x1
jax: 0.10.0
libtpu: 0.0.40
codegen_flags: <defaults>
</compile_context>

<pallas_src>
import jax
import jax.numpy as jnp
from jax.experimental import pallas as pl
from jax.experimental.pallas import tpu as pltpu


def _round_up(x, m):
    return (x + m - 1) // m * m


def autoencoder_kernel(x_ref,
                       w1, b1, w2, b2, w3, b3, w4, b4,   # encoder
                       w5, b5, w6, b6, w7, b7, w8, b8,   # decoder
                       o_ref):
    """Fused 8-layer MLP autoencoder on one batch tile (all layers in VMEM)."""

    def layer(h, w_ref, b_ref, relu):
        # Cast activation to the (possibly bf16) weight dtype, accumulate in f32.
        y = jnp.dot(h.astype(w_ref.dtype), w_ref[...],
                    preferred_element_type=jnp.float32) + b_ref[...]
        return jnp.maximum(y, 0.0) if relu else y

    h = x_ref[...].astype(jnp.float32)

    # Encoder: 3x (Linear + ReLU) + Linear (no ReLU on the bottleneck output)
    h = layer(h, w1, b1, True)
    h = layer(h, w2, b2, True)
    h = layer(h, w3, b3, True)
    h = layer(h, w4, b4, False)

    # Decoder: 3x (Linear + ReLU) + Linear (no ReLU on the reconstruction)
    h = layer(h, w5, b5, True)
    h = layer(h, w6, b6, True)
    h = layer(h, w7, b7, True)
    h = layer(h, w8, b8, False)

    o_ref[...] = h.astype(o_ref.dtype)


def autoencoder_forward(x, params, *, tile_b=256, compute_dtype=jnp.bfloat16):
    """x: (B, size) f32. params: list of 8 (W(in,out), b(1,out)) pairs."""
    B, size = x.shape
    n_layers = len(params)

    # Lane-dense feature axis (multiple of 128) and a batch tile that is a
    # multiple of 8 sublanes; batch padded up to a whole number of tiles.
    size_p = _round_up(size, 128)
    tb = min(tile_b, _round_up(B, 8))
    Bp = _round_up(B, tb)

    xp = x
    if (Bp, size_p) != (B, size):
        xp = jnp.pad(x, ((0, Bp - B), (0, size_p - size)))

    # Prepare params: bf16 weights (f32 accumulation in-kernel), f32 biases.
    # First / last layers are zero-padded to the padded feature dim (zero rows/
    # cols contribute nothing, so semantics are preserved).
    flat_params, param_specs, layer_dims = [], [], []
    for li, (w, b) in enumerate(params):
        w = w.astype(compute_dtype)
        b = b.astype(jnp.float32)
        if li == 0 and size_p != size:
            w = jnp.pad(w, ((0, size_p - size), (0, 0)))
        if li == n_layers - 1 and size_p != size:
            w = jnp.pad(w, ((0, 0), (0, size_p - size)))
            b = jnp.pad(b, ((0, 0), (0, size_p - size)))
        layer_dims.append(w.shape)
        flat_params.extend([w, b])
        # Full-extent blocks with a constant index_map: fetched once, resident.
        param_specs.append(pl.BlockSpec(w.shape, lambda i: (0, 0)))
        param_specs.append(pl.BlockSpec(b.shape, lambda i: (0, 0)))

    x_spec = pl.BlockSpec((tb, size_p), lambda i: (i, 0))
    o_spec = pl.BlockSpec((tb, size_p), lambda i: (i, 0))

    # Advisory cost estimate for XLA scheduling.
    flops = 2 * Bp * sum(din * dout for din, dout in layer_dims)
    param_bytes = sum(int(a.size) * a.dtype.itemsize for a in flat_params)
    io_bytes = 2 * Bp * size_p * 4
    cost = pl.CostEstimate(flops=flops, transcendentals=0,
                           bytes_accessed=io_bytes + param_bytes)

    # Scoped-VMEM budget: double-buffered in/out tiles + (conservatively
    # double-buffered) params, with headroom; capped at 64 MiB (v7x-safe).
    vmem_need = 2 * (2 * tb * size_p * 4) + 2 * param_bytes
    vmem_limit = int(min(max(4 * vmem_need, 32 * 1024 * 1024), 64 * 1024 * 1024))

    out = pl.pallas_call(
        autoencoder_kernel,
        out_shape=jax.ShapeDtypeStruct((Bp, size_p), jnp.float32),
        grid_spec=pltpu.PrefetchScalarGridSpec(
            num_scalar_prefetch=0,
            grid=(Bp // tb,),
            in_specs=[x_spec] + param_specs,
            out_specs=o_spec,
        ),
        compiler_params=pltpu.CompilerParams(
            dimension_semantics=("parallel",),
            vmem_limit_bytes=vmem_limit),
        cost_estimate=cost,
    )(xp, *flat_params)

    if (Bp, size_p) != (B, size):
        out = out[:B, :size]
    return out


def init_params(key, size, hidden1=64, hidden2=32, hidden3=16, hidden4=8):
    """Deterministic init mimicking nn.Linear's default U(-1/sqrt(fan_in), +)."""
    dims = [size, hidden1, hidden2, hidden3, hidden4,   # encoder
            hidden3, hidden2, hidden1, size]            # decoder
    params = []
    for li in range(8):
        fan_in, fan_out = dims[li], dims[li + 1]
        key, kw, kb = jax.random.split(key, 3)
        bound = 1.0 / jnp.sqrt(float(fan_in))
        w = jax.random.uniform(kw, (fan_in, fan_out), jnp.float32, -bound, bound)
        b = jax.random.uniform(kb, (1, fan_out), jnp.float32, -bound, bound)
        params.append((w, b))
    return params


def reference_forward(x, params, compute_dtype=jnp.float32):
    """Pure-JAX reference.  compute_dtype mirrors the kernel's matmul dtype."""
    h = x.astype(jnp.float32)
    for i, (w, b) in enumerate(params):
        h = jnp.dot(h.astype(compute_dtype), w.astype(compute_dtype),
                    preferred_element_type=jnp.float32) + b
        if i not in (3, 7):   # no ReLU on bottleneck output / reconstruction
            h = jnp.maximum(h, 0.0)
    return h


if __name__ == "__main__":
    key = jax.random.PRNGKey(0)
    k1, k2, k3, k4 = jax.random.split(key, 4)

    # --- Test 1: lane-dense size, bf16 compute, multi-tile grid (2 tiles) ---
    size, batch = 128, 512
    x = jax.random.normal(k1, (batch, size), jnp.float32)
    params = init_params(k2, size)

    out = jax.block_until_ready(
        autoencoder_forward(x, params, tile_b=256, compute_dtype=jnp.bfloat16))
    assert out.shape == (batch, size)
    # Tight check vs matched-precision (bf16-matmul / f32-acc) reference.
    ref_bf16 = reference_forward(x, params, compute_dtype=jnp.bfloat16)
    assert jnp.allclose(out, ref_bf16, atol=2e-3, rtol=2e-3), "mismatch vs bf16 reference"
    # Loose sanity check vs full-f32 reference (covers bf16 quantization only).
    ref_f32 = reference_forward(x, params)
    assert jnp.allclose(out, ref_f32, atol=1e-1, rtol=1e-1), "mismatch vs f32 reference"

    # --- Test 2: padding path (feature not a multiple of 128, ragged batch), f32 compute ---
    size2, batch2 = 96, 50
    x2 = jax.random.normal(k3, (batch2, size2), jnp.float32)
    params2 = init_params(k4, size2)

    out2 = jax.block_until_ready(
        autoencoder_forward(x2, params2, tile_b=256, compute_dtype=jnp.float32))
    assert out2.shape == (batch2, size2)
    ref2 = reference_forward(x2, params2)
    assert jnp.allclose(out2, ref2, atol=1e-4, rtol=1e-4), "mismatch vs f32 reference (padded path)"

    print("KERNEL_OK")
</pallas_src>

<mosaic_0001>
module attributes {stable_mosaic.version = 11 : i64} {
  func.func @autoencoder_kernel(%arg0: i32, %arg1: memref<256x128xf32, #tpu.memory_space<vmem>>, %arg2: memref<128x64xbf16, #tpu.memory_space<vmem>>, %arg3: memref<1x64xf32, #tpu.memory_space<vmem>>, %arg4: memref<64x32xbf16, #tpu.memory_space<vmem>>, %arg5: memref<1x32xf32, #tpu.memory_space<vmem>>, %arg6: memref<32x16xbf16, #tpu.memory_space<vmem>>, %arg7: memref<1x16xf32, #tpu.memory_space<vmem>>, %arg8: memref<16x8xbf16, #tpu.memory_space<vmem>>, %arg9: memref<1x8xf32, #tpu.memory_space<vmem>>, %arg10: memref<8x16xbf16, #tpu.memory_space<vmem>>, %arg11: memref<1x16xf32, #tpu.memory_space<vmem>>, %arg12: memref<16x32xbf16, #tpu.memory_space<vmem>>, %arg13: memref<1x32xf32, #tpu.memory_space<vmem>>, %arg14: memref<32x64xbf16, #tpu.memory_space<vmem>>, %arg15: memref<1x64xf32, #tpu.memory_space<vmem>>, %arg16: memref<64x128xbf16, #tpu.memory_space<vmem>>, %arg17: memref<1x128xf32, #tpu.memory_space<vmem>>, %arg18: memref<256x128xf32, #tpu.memory_space<vmem>>) attributes {dimension_semantics = [#tpu.dimension_semantics<parallel>], iteration_bounds = array<i64: 2>, scalar_prefetch = 0 : i64, scratch_operands = 0 : i64, tpu.core_type = #tpu.core_type<tc>, window_params = [{transform_indices = @transform_0, window_bounds = array<i64: 256, 128>}, {pipeline_mode = #tpu.pipeline_mode<synchronous>, transform_indices = @transform_1, window_bounds = array<i64: 128, 64>}, {pipeline_mode = #tpu.pipeline_mode<synchronous>, transform_indices = @transform_2, window_bounds = array<i64: 1, 64>}, {pipeline_mode = #tpu.pipeline_mode<synchronous>, transform_indices = @transform_3, window_bounds = array<i64: 64, 32>}, {pipeline_mode = #tpu.pipeline_mode<synchronous>, transform_indices = @transform_4, window_bounds = array<i64: 1, 32>}, {pipeline_mode = #tpu.pipeline_mode<synchronous>, transform_indices = @transform_5, window_bounds = array<i64: 32, 16>}, {pipeline_mode = #tpu.pipeline_mode<synchronous>, transform_indices = @transform_6, window_bounds = array<i64: 1, 16>}, {pipeline_mode = #tpu.pipeline_mode<synchronous>, transform_indices = @transform_7, window_bounds = array<i64: 16, 8>}, {pipeline_mode = #tpu.pipeline_mode<synchronous>, transform_indices = @transform_8, window_bounds = array<i64: 1, 8>}, {pipeline_mode = #tpu.pipeline_mode<synchronous>, transform_indices = @transform_9, window_bounds = array<i64: 8, 16>}, {pipeline_mode = #tpu.pipeline_mode<synchronous>, transform_indices = @transform_10, window_bounds = array<i64: 1, 16>}, {pipeline_mode = #tpu.pipeline_mode<synchronous>, transform_indices = @transform_11, window_bounds = array<i64: 16, 32>}, {pipeline_mode = #tpu.pipeline_mode<synchronous>, transform_indices = @transform_12, window_bounds = array<i64: 1, 32>}, {pipeline_mode = #tpu.pipeline_mode<synchronous>, transform_indices = @transform_13, window_bounds = array<i64: 32, 64>}, {pipeline_mode = #tpu.pipeline_mode<synchronous>, transform_indices = @transform_14, window_bounds = array<i64: 1, 64>}, {pipeline_mode = #tpu.pipeline_mode<synchronous>, transform_indices = @transform_15, window_bounds = array<i64: 64, 128>}, {pipeline_mode = #tpu.pipeline_mode<synchronous>, transform_indices = @transform_16, window_bounds = array<i64: 1, 128>}, {transform_indices = @transform_17, window_bounds = array<i64: 256, 128>}]} {
    %c0 = arith.constant 0 : index
    %c0_0 = arith.constant 0 : index
    %0 = vector.load %arg1[%c0, %c0_0] : memref<256x128xf32, #tpu.memory_space<vmem>>, vector<256x128xf32>
    %1 = arith.truncf %0 : vector<256x128xf32> to vector<256x128xbf16>
    %c0_1 = arith.constant 0 : index
    %c0_2 = arith.constant 0 : index
    %2 = vector.load %arg2[%c0_1, %c0_2] : memref<128x64xbf16, #tpu.memory_space<vmem>>, vector<128x64xbf16>
    %cst = arith.constant dense<0.000000e+00> : vector<256x64xf32>
    %3 = tpu.matmul %1, %2, %cst {dimension_numbers = #tpu.dot_dimension_numbers<[1], [0], [0], [1], [0, 0, 1, 1], [], []>} : vector<256x128xbf16>, vector<128x64xbf16>, vector<256x64xf32> -> vector<256x64xf32>
    %c0_3 = arith.constant 0 : index
    %c0_4 = arith.constant 0 : index
    %4 = vector.load %arg3[%c0_3, %c0_4] : memref<1x64xf32, #tpu.memory_space<vmem>>, vector<1x64xf32>
    %5 = vector.broadcast %4 : vector<1x64xf32> to vector<256x64xf32>
    %6 = arith.addf %3, %5 : vector<256x64xf32>
    %cst_5 = arith.constant 0.000000e+00 : f32
    %7 = vector.broadcast %cst_5 : f32 to vector<256x64xf32>
    %8 = arith.maximumf %6, %7 : vector<256x64xf32>
    %9 = arith.truncf %8 : vector<256x64xf32> to vector<256x64xbf16>
    %c0_6 = arith.constant 0 : index
    %c0_7 = arith.constant 0 : index
    %10 = vector.load %arg4[%c0_6, %c0_7] : memref<64x32xbf16, #tpu.memory_space<vmem>>, vector<64x32xbf16>
    %cst_8 = arith.constant dense<0.000000e+00> : vector<256x32xf32>
    %11 = tpu.matmul %9, %10, %cst_8 {dimension_numbers = #tpu.dot_dimension_numbers<[1], [0], [0], [1], [0, 0, 1, 1], [], []>} : vector<256x64xbf16>, vector<64x32xbf16>, vector<256x32xf32> -> vector<256x32xf32>
    %c0_9 = arith.constant 0 : index
    %c0_10 = arith.constant 0 : index
    %12 = vector.load %arg5[%c0_9, %c0_10] : memref<1x32xf32, #tpu.memory_space<vmem>>, vector<1x32xf32>
    %13 = vector.broadcast %12 : vector<1x32xf32> to vector<256x32xf32>
    %14 = arith.addf %11, %13 : vector<256x32xf32>
    %cst_11 = arith.constant 0.000000e+00 : f32
    %15 = vector.broadcast %cst_11 : f32 to vector<256x32xf32>
    %16 = arith.maximumf %14, %15 : vector<256x32xf32>
    %17 = arith.truncf %16 : vector<256x32xf32> to vector<256x32xbf16>
    %c0_12 = arith.constant 0 : index
    %c0_13 = arith.constant 0 : index
    %18 = vector.load %arg6[%c0_12, %c0_13] : memref<32x16xbf16, #tpu.memory_space<vmem>>, vector<32x16xbf16>
    %cst_14 = arith.constant dense<0.000000e+00> : vector<256x16xf32>
    %19 = tpu.matmul %17, %18, %cst_14 {dimension_numbers = #tpu.dot_dimension_numbers<[1], [0], [0], [1], [0, 0, 1, 1], [], []>} : vector<256x32xbf16>, vector<32x16xbf16>, vector<256x16xf32> -> vector<256x16xf32>
    %c0_15 = arith.constant 0 : index
    %c0_16 = arith.constant 0 : index
    %20 = vector.load %arg7[%c0_15, %c0_16] : memref<1x16xf32, #tpu.memory_space<vmem>>, vector<1x16xf32>
    %21 = vector.broadcast %20 : vector<1x16xf32> to vector<256x16xf32>
    %22 = arith.addf %19, %21 : vector<256x16xf32>
    %cst_17 = arith.constant 0.000000e+00 : f32
    %23 = vector.broadcast %cst_17 : f32 to vector<256x16xf32>
    %24 = arith.maximumf %22, %23 : vector<256x16xf32>
    %25 = arith.truncf %24 : vector<256x16xf32> to vector<256x16xbf16>
    %c0_18 = arith.constant 0 : index
    %c0_19 = arith.constant 0 : index
    %26 = vector.load %arg8[%c0_18, %c0_19] : memref<16x8xbf16, #tpu.memory_space<vmem>>, vector<16x8xbf16>
    %cst_20 = arith.constant dense<0.000000e+00> : vector<256x8xf32>
    %27 = tpu.matmul %25, %26, %cst_20 {dimension_numbers = #tpu.dot_dimension_numbers<[1], [0], [0], [1], [0, 0, 1, 1], [], []>} : vector<256x16xbf16>, vector<16x8xbf16>, vector<256x8xf32> -> vector<256x8xf32>
    %c0_21 = arith.constant 0 : index
    %c0_22 = arith.constant 0 : index
    %28 = vector.load %arg9[%c0_21, %c0_22] : memref<1x8xf32, #tpu.memory_space<vmem>>, vector<1x8xf32>
    %29 = vector.broadcast %28 : vector<1x8xf32> to vector<256x8xf32>
    %30 = arith.addf %27, %29 : vector<256x8xf32>
    %31 = arith.truncf %30 : vector<256x8xf32> to vector<256x8xbf16>
    %c0_23 = arith.constant 0 : index
    %c0_24 = arith.constant 0 : index
    %32 = vector.load %arg10[%c0_23, %c0_24] : memref<8x16xbf16, #tpu.memory_space<vmem>>, vector<8x16xbf16>
    %cst_25 = arith.constant dense<0.000000e+00> : vector<256x16xf32>
    %33 = tpu.matmul %31, %32, %cst_25 {dimension_numbers = #tpu.dot_dimension_numbers<[1], [0], [0], [1], [0, 0, 1, 1], [], []>} : vector<256x8xbf16>, vector<8x16xbf16>, vector<256x16xf32> -> vector<256x16xf32>
    %c0_26 = arith.constant 0 : index
    %c0_27 = arith.constant 0 : index
    %34 = vector.load %arg11[%c0_26, %c0_27] : memref<1x16xf32, #tpu.memory_space<vmem>>, vector<1x16xf32>
    %35 = vector.broadcast %34 : vector<1x16xf32> to vector<256x16xf32>
    %36 = arith.addf %33, %35 : vector<256x16xf32>
    %cst_28 = arith.constant 0.000000e+00 : f32
    %37 = vector.broadcast %cst_28 : f32 to vector<256x16xf32>
    %38 = arith.maximumf %36, %37 : vector<256x16xf32>
    %39 = arith.truncf %38 : vector<256x16xf32> to vector<256x16xbf16>
    %c0_29 = arith.constant 0 : index
    %c0_30 = arith.constant 0 : index
    %40 = vector.load %arg12[%c0_29, %c0_30] : memref<16x32xbf16, #tpu.memory_space<vmem>>, vector<16x32xbf16>
    %cst_31 = arith.constant dense<0.000000e+00> : vector<256x32xf32>
    %41 = tpu.matmul %39, %40, %cst_31 {dimension_numbers = #tpu.dot_dimension_numbers<[1], [0], [0], [1], [0, 0, 1, 1], [], []>} : vector<256x16xbf16>, vector<16x32xbf16>, vector<256x32xf32> -> vector<256x32xf32>
    %c0_32 = arith.constant 0 : index
    %c0_33 = arith.constant 0 : index
    %42 = vector.load %arg13[%c0_32, %c0_33] : memref<1x32xf32, #tpu.memory_space<vmem>>, vector<1x32xf32>
    %43 = vector.broadcast %42 : vector<1x32xf32> to vector<256x32xf32>
    %44 = arith.addf %41, %43 : vector<256x32xf32>
    %cst_34 = arith.constant 0.000000e+00 : f32
    %45 = vector.broadcast %cst_34 : f32 to vector<256x32xf32>
    %46 = arith.maximumf %44, %45 : vector<256x32xf32>
    %47 = arith.truncf %46 : vector<256x32xf32> to vector<256x32xbf16>
    %c0_35 = arith.constant 0 : index
    %c0_36 = arith.constant 0 : index
    %48 = vector.load %arg14[%c0_35, %c0_36] : memref<32x64xbf16, #tpu.memory_space<vmem>>, vector<32x64xbf16>
    %cst_37 = arith.constant dense<0.000000e+00> : vector<256x64xf32>
    %49 = tpu.matmul %47, %48, %cst_37 {dimension_numbers = #tpu.dot_dimension_numbers<[1], [0], [0], [1], [0, 0, 1, 1], [], []>} : vector<256x32xbf16>, vector<32x64xbf16>, vector<256x64xf32> -> vector<256x64xf32>
    %c0_38 = arith.constant 0 : index
    %c0_39 = arith.constant 0 : index
    %50 = vector.load %arg15[%c0_38, %c0_39] : memref<1x64xf32, #tpu.memory_space<vmem>>, vector<1x64xf32>
    %51 = vector.broadcast %50 : vector<1x64xf32> to vector<256x64xf32>
    %52 = arith.addf %49, %51 : vector<256x64xf32>
    %cst_40 = arith.constant 0.000000e+00 : f32
    %53 = vector.broadcast %cst_40 : f32 to vector<256x64xf32>
    %54 = arith.maximumf %52, %53 : vector<256x64xf32>
    %55 = arith.truncf %54 : vector<256x64xf32> to vector<256x64xbf16>
    %c0_41 = arith.constant 0 : index
    %c0_42 = arith.constant 0 : index
    %56 = vector.load %arg16[%c0_41, %c0_42] : memref<64x128xbf16, #tpu.memory_space<vmem>>, vector<64x128xbf16>
    %cst_43 = arith.constant dense<0.000000e+00> : vector<256x128xf32>
    %57 = tpu.matmul %55, %56, %cst_43 {dimension_numbers = #tpu.dot_dimension_numbers<[1], [0], [0], [1], [0, 0, 1, 1], [], []>} : vector<256x64xbf16>, vector<64x128xbf16>, vector<256x128xf32> -> vector<256x128xf32>
    %c0_44 = arith.constant 0 : index
    %c0_45 = arith.constant 0 : index
    %58 = vector.load %arg17[%c0_44, %c0_45] : memref<1x128xf32, #tpu.memory_space<vmem>>, vector<1x128xf32>
    %59 = vector.broadcast %58 : vector<1x128xf32> to vector<256x128xf32>
    %60 = arith.addf %57, %59 : vector<256x128xf32>
    %c0_46 = arith.constant 0 : index
    %c0_47 = arith.constant 0 : index
    %61 = vector.load %arg18[%c0_46, %c0_47] : memref<256x128xf32, #tpu.memory_space<vmem>>, vector<256x128xf32>
    tpu.vector_store %arg18[%c0_46, %c0_47], %60 {strides = array<i32>} : memref<256x128xf32, #tpu.memory_space<vmem>>, vector<256x128xf32>,
    return
  }
  func.func @transform_0(%arg0: i32) -> (i32, i32) {
    %c0_i32 = arith.constant 0 : i32
    %c0_i32_0 = arith.constant 0 : i32
    return %arg0, %c0_i32 : i32, i32
  }
  func.func @transform_1(%arg0: i32) -> (i32, i32) {
    %c0_i32 = arith.constant 0 : i32
    %c0_i32_0 = arith.constant 0 : i32
    %c0_i32_1 = arith.constant 0 : i32
    return %c0_i32, %c0_i32_0 : i32, i32
  }
  func.func @transform_2(%arg0: i32) -> (i32, i32) {
    %c0_i32 = arith.constant 0 : i32
    %c0_i32_0 = arith.constant 0 : i32
    %c0_i32_1 = arith.constant 0 : i32
    return %c0_i32, %c0_i32_0 : i32, i32
  }
  func.func @transform_3(%arg0: i32) -> (i32, i32) {
    %c0_i32 = arith.constant 0 : i32
    %c0_i32_0 = arith.constant 0 : i32
    %c0_i32_1 = arith.constant 0 : i32
    return %c0_i32, %c0_i32_0 : i32, i32
  }
  func.func @transform_4(%arg0: i32) -> (i32, i32) {
    %c0_i32 = arith.constant 0 : i32
    %c0_i32_0 = arith.constant 0 : i32
    %c0_i32_1 = arith.constant 0 : i32
    return %c0_i32, %c0_i32_0 : i32, i32
  }
  func.func @transform_5(%arg0: i32) -> (i32, i32) {
    %c0_i32 = arith.constant 0 : i32
    %c0_i32_0 = arith.constant 0 : i32
    %c0_i32_1 = arith.constant 0 : i32
    return %c0_i32, %c0_i32_0 : i32, i32
  }
  func.func @transform_6(%arg0: i32) -> (i32, i32) {
    %c0_i32 = arith.constant 0 : i32
    %c0_i32_0 = arith.constant 0 : i32
    %c0_i32_1 = arith.constant 0 : i32
    return %c0_i32, %c0_i32_0 : i32, i32
  }
  func.func @transform_7(%arg0: i32) -> (i32, i32) {
    %c0_i32 = arith.constant 0 : i32
    %c0_i32_0 = arith.constant 0 : i32
    %c0_i32_1 = arith.constant 0 : i32
    return %c0_i32, %c0_i32_0 : i32, i32
  }
  func.func @transform_8(%arg0: i32) -> (i32, i32) {
    %c0_i32 = arith.constant 0 : i32
    %c0_i32_0 = arith.constant 0 : i32
    %c0_i32_1 = arith.constant 0 : i32
    return %c0_i32, %c0_i32_0 : i32, i32
  }
  func.func @transform_9(%arg0: i32) -> (i32, i32) {
    %c0_i32 = arith.constant 0 : i32
    %c0_i32_0 = arith.constant 0 : i32
    %c0_i32_1 = arith.constant 0 : i32
    return %c0_i32, %c0_i32_0 : i32, i32
  }
  func.func @transform_10(%arg0: i32) -> (i32, i32) {
    %c0_i32 = arith.constant 0 : i32
    %c0_i32_0 = arith.constant 0 : i32
    %c0_i32_1 = arith.constant 0 : i32
    return %c0_i32, %c0_i32_0 : i32, i32
  }
  func.func @transform_11(%arg0: i32) -> (i32, i32) {
    %c0_i32 = arith.constant 0 : i32
    %c0_i32_0 = arith.constant 0 : i32
    %c0_i32_1 = arith.constant 0 : i32
    return %c0_i32, %c0_i32_0 : i32, i32
  }
  func.func @transform_12(%arg0: i32) -> (i32, i32) {
    %c0_i32 = arith.constant 0 : i32
    %c0_i32_0 = arith.constant 0 : i32
    %c0_i32_1 = arith.constant 0 : i32
    return %c0_i32, %c0_i32_0 : i32, i32
  }
  func.func @transform_13(%arg0: i32) -> (i32, i32) {
    %c0_i32 = arith.constant 0 : i32
    %c0_i32_0 = arith.constant 0 : i32
    %c0_i32_1 = arith.constant 0 : i32
    return %c0_i32, %c0_i32_0 : i32, i32
  }
  func.func @transform_14(%arg0: i32) -> (i32, i32) {
    %c0_i32 = arith.constant 0 : i32
    %c0_i32_0 = arith.constant 0 : i32
    %c0_i32_1 = arith.constant 0 : i32
    return %c0_i32, %c0_i32_0 : i32, i32
  }
  func.func @transform_15(%arg0: i32) -> (i32, i32) {
    %c0_i32 = arith.constant 0 : i32
    %c0_i32_0 = arith.constant 0 : i32
    %c0_i32_1 = arith.constant 0 : i32
    return %c0_i32, %c0_i32_0 : i32, i32
  }
  func.func @transform_16(%arg0: i32) -> (i32, i32) {
    %c0_i32 = arith.constant 0 : i32
    %c0_i32_0 = arith.constant 0 : i32
    %c0_i32_1 = arith.constant 0 : i32
    return %c0_i32, %c0_i32_0 : i32, i32
  }
  func.func @transform_17(%arg0: i32) -> (i32, i32) {
    %c0_i32 = arith.constant 0 : i32
    %c0_i32_0 = arith.constant 0 : i32
    return %arg0, %c0_i32 : i32, i32
  }
}

</mosaic_0001>

<llo_original>
// kernel: tpu_custom_call.1
$region0: #{tpu_custom_call.1}
  #allocation0 [shape = 'u32[]', space=smem, size = 0x4, offset = 0x4, fixed_abs, tag = 'smem constant byte address 0x4 - core index']
  #allocation1 [shape = 'u32[144,128]{1,0:T(1,128)}', space=vmem, size = 0x12000, scoped, tag = 'internal scratch']
  %s0 = inlined_call_operand.hbm [shape: f32[512,128], index: 0, kind: input, shape index: {}]
  %s1 = inlined_call_operand.vmem [shape: bf16[128,64], index: 1, kind: input, shape index: {}]
  %s2 = inlined_call_operand.vmem [shape: f32[1,64], index: 2, kind: input, shape index: {}]
  %s3 = inlined_call_operand.vmem [shape: bf16[64,32], index: 3, kind: input, shape index: {}]
  %s4 = inlined_call_operand.vmem [shape: f32[1,32], index: 4, kind: input, shape index: {}]
  %s5 = inlined_call_operand.vmem [shape: bf16[32,16], index: 5, kind: input, shape index: {}]
  %s6 = inlined_call_operand.vmem [shape: f32[1,16], index: 6, kind: input, shape index: {}]
  %s7 = inlined_call_operand.vmem [shape: bf16[16,8], index: 7, kind: input, shape index: {}]
  %s8 = inlined_call_operand.vmem [shape: f32[1,8], index: 8, kind: input, shape index: {}]
  %s9 = inlined_call_operand.vmem [shape: bf16[8,16], index: 9, kind: input, shape index: {}]
  %s10 = inlined_call_operand.vmem [shape: f32[1,16], index: 10, kind: input, shape index: {}]
  %s11 = inlined_call_operand.vmem [shape: bf16[16,32], index: 11, kind: input, shape index: {}]
  %s12 = inlined_call_operand.vmem [shape: f32[1,32], index: 12, kind: input, shape index: {}]
  %s13 = inlined_call_operand.vmem [shape: bf16[32,64], index: 13, kind: input, shape index: {}]
  %s14 = inlined_call_operand.vmem [shape: f32[1,64], index: 14, kind: input, shape index: {}]
  %s15 = inlined_call_operand.vmem [shape: bf16[64,128], index: 15, kind: input, shape index: {}]
  %s16 = inlined_call_operand.vmem [shape: f32[1,128], index: 16, kind: input, shape index: {}]
  %s17 = inlined_call_operand.hbm [shape: f32[512,128], index: 17, kind: output, shape index: {}]
  %s18 = sld [smem:[#allocation0]]
  $region105: #{tpu_custom_call.1} parent=0
    _
  %s20 = ssub.s32 1, %s18
  %s21 = scalar_select 0, %s20, %s18
  $region1: #{tpu_custom_call.1} parent=0
    #allocation2 [shape = 'u8[262144]{0}', space=vmem, size = 0x40000, scoped, tag = 'input window, operand 0']
    #allocation3 [shape = 's32[2]{0}', space=sflag, size = 0x8, scoped, tag = 'scoped memory for tpu_custom_call.1']
    #allocation4 [shape = 's32[2]{0}', space=sflag, size = 0x8, scoped, tag = 'scoped memory for tpu_custom_call.1']
    #allocation5 [shape = 'u8[262144]{0}', space=vmem, size = 0x40000, scoped, tag = 'output window, operand 0']
    %22 = vsyncpa [#allocation3], 0
    %s23 = scalar_lea.sflag [#allocation3], 1
    %24 = vsyncpa %s23, 0
    %25 = vsyncpa [#allocation4], 0
    %s26 = scalar_lea.sflag [#allocation4], 1
    %27 = vsyncpa %s26, 0
    loop: start=0, step=1, limit=4
    $region2: #{tpu_custom_call.1} parent=1 // loop_pre_header
      _
    $region3: #{tpu_custom_call.1} parent=1 // loop_header
      %s29 = sphi 0, %s33
      %p30 = scmp.ge.s32.totalorder %s29, 4
      %s39 = sphi 0, %s41
      %s42 = sphi 0, %s39
      %s43 = sphi 0, %s42
      %s59 = sphi 0, %s43
      %s63 = sphi 0, %s63
      %s65 = sphi 0, %s63
      %s66 = sphi 0, %s65
      %s80 = sphi 0, %s66
      %s84 = sphi 0, %s84
      %s86 = sphi 0, %s84
      %s87 = sphi 0, %s86
      %s101 = sphi 0, %s87
      %s105 = sphi 0, %s105
      %s107 = sphi 0, %s105
      %s108 = sphi 0, %s107
      %s122 = sphi 0, %s108
      %s126 = sphi 0, %s126
      %s128 = sphi 0, %s126
      %s129 = sphi 0, %s128
      %s143 = sphi 0, %s129
      %s147 = sphi 0, %s147
      %s149 = sphi 0, %s147
      %s150 = sphi 0, %s149
      %s164 = sphi 0, %s150
      %s168 = sphi 0, %s168
      %s170 = sphi 0, %s168
      %s171 = sphi 0, %s170
      %s185 = sphi 0, %s171
      %s189 = sphi 0, %s189
      %s191 = sphi 0, %s189
      %s192 = sphi 0, %s191
      %s206 = sphi 0, %s192
      %s210 = sphi 0, %s210
      %s212 = sphi 0, %s210
      %s213 = sphi 0, %s212
      %s227 = sphi 0, %s213
      %s231 = sphi 0, %s231
      %s233 = sphi 0, %s231
      %s234 = sphi 0, %s233
      %s248 = sphi 0, %s234
      %s252 = sphi 0, %s252
      %s254 = sphi 0, %s252
      %s255 = sphi 0, %s254
      %s269 = sphi 0, %s255
      %s273 = sphi 0, %s273
      %s275 = sphi 0, %s273
      %s276 = sphi 0, %s275
      %s290 = sphi 0, %s276
      %s294 = sphi 0, %s294
      %s296 = sphi 0, %s294
      %s297 = sphi 0, %s296
      %s311 = sphi 0, %s297
      %s315 = sphi 0, %s315
      %s317 = sphi 0, %s315
      %s318 = sphi 0, %s317
      %s332 = sphi 0, %s318
      %s336 = sphi 0, %s336
      %s338 = sphi 0, %s336
      %s339 = sphi 0, %s338
      %s353 = sphi 0, %s339
      %s357 = sphi 0, %s357
      %s359 = sphi 0, %s357
      %s360 = sphi 0, %s359
      %s374 = sphi 0, %s360
      %s378 = sphi 0, %s378
      %s380 = sphi 0, %s378
      %s381 = sphi 0, %s380
      %s395 = sphi 0, %s381
      %s401 = sphi 0, %s403
      %s404 = sphi 0, %s401
      %s405 = sphi 0, %s404
      %s421 = sphi 0, %s405
    $region4: #{tpu_custom_call.1} parent=1 // loop_header_branch
      %32 = sbr.rel (%p30) target = $region8
    $region5: #{tpu_custom_call.1} parent=1 // loop_body
      %s34 = ssub.s32 %s29, 1
      %s35 = ssub.s32 %s29, 2
      %s36 = sadd.s32 %s29, 1
      %s37 = ssub.s32 %s29, %s36
      %p38 = scmp.eq.s32.totalorder %s37, 0
      %s40 = sadd.s32 %s39, 1
      %s41 = scalar_select %p38, %s39, %s40
      %p44 = pneg %p38
      %p45 = scmp.eq.s32.totalorder %s29, 1
      %p46 = por %p44, %p45
      %p47 = scmp.ne.s32.totalorder %s39, %s42
      %p48 = scmp.eq.s32.totalorder %s29, 0
      %p49 = por %p47, %p48
      %p50 = scmp.ne.s32.totalorder %s39, %s42
      %p51 = scmp.eq.s32.totalorder %s34, 1
      %p52 = por %p50, %p51
      %p53 = scmp.ne.s32.totalorder %s42, %s43
      %p54 = scmp.eq.s32.totalorder %s34, 0
      %p55 = por %p53, %p54
      %p56 = scmp.ne.s32.totalorder %s42, %s43
      %p57 = scmp.eq.s32.totalorder %s35, 1
      %p58 = por %p56, %p57
      %p60 = scmp.ne.s32.totalorder %s43, %s59
      %p61 = scmp.eq.s32.totalorder %s35, 0
      %p62 = por %p60, %p61
      %s64 = sadd.s32 %s63, 1
      %p67 = scmp.eq.s32.totalorder %s29, 1
      %p68 = scmp.ne.s32.totalorder %s63, %s65
      %p69 = scmp.eq.s32.totalorder %s29, 0
      %p70 = por %p68, %p69
      %p71 = scmp.ne.s32.totalorder %s63, %s65
      %p72 = scmp.eq.s32.totalorder %s34, 1
      %p73 = por %p71, %p72
      %p74 = scmp.ne.s32.totalorder %s65, %s66
      %p75 = scmp.eq.s32.totalorder %s34, 0
      %p76 = por %p74, %p75
      %p77 = scmp.ne.s32.totalorder %s65, %s66
      %p78 = scmp.eq.s32.totalorder %s35, 1
      %p79 = por %p77, %p78
      %p81 = scmp.ne.s32.totalorder %s66, %s80
      %p82 = scmp.eq.s32.totalorder %s35, 0
      %p83 = por %p81, %p82
      %s85 = sadd.s32 %s84, 1
      %p88 = scmp.eq.s32.totalorder %s29, 1
      %p89 = scmp.ne.s32.totalorder %s84, %s86
      %p90 = scmp.eq.s32.totalorder %s29, 0
      %p91 = por %p89, %p90
      %p92 = scmp.ne.s32.totalorder %s84, %s86
      %p93 = scmp.eq.s32.totalorder %s34, 1
      %p94 = por %p92, %p93
      %p95 = scmp.ne.s32.totalorder %s86, %s87
      %p96 = scmp.eq.s32.totalorder %s34, 0
      %p97 = por %p95, %p96
      %p98 = scmp.ne.s32.totalorder %s86, %s87
      %p99 = scmp.eq.s32.totalorder %s35, 1
      %p100 = por %p98, %p99
      %p102 = scmp.ne.s32.totalorder %s87, %s101
      %p103 = scmp.eq.s32.totalorder %s35, 0
      %p104 = por %p102, %p103
      %s106 = sadd.s32 %s105, 1
      %p109 = scmp.eq.s32.totalorder %s29, 1
      %p110 = scmp.ne.s32.totalorder %s105, %s107
      %p111 = scmp.eq.s32.totalorder %s29, 0
      %p112 = por %p110, %p111
      %p113 = scmp.ne.s32.totalorder %s105, %s107
      %p114 = scmp.eq.s32.totalorder %s34, 1
      %p115 = por %p113, %p114
      %p116 = scmp.ne.s32.totalorder %s107, %s108
      %p117 = scmp.eq.s32.totalorder %s34, 0
      %p118 = por %p116, %p117
      %p119 = scmp.ne.s32.totalorder %s107, %s108
      %p120 = scmp.eq.s32.totalorder %s35, 1
      %p121 = por %p119, %p120
      %p123 = scmp.ne.s32.totalorder %s108, %s122
      %p124 = scmp.eq.s32.totalorder %s35, 0
      %p125 = por %p123, %p124
      %s127 = sadd.s32 %s126, 1
      %p130 = scmp.eq.s32.totalorder %s29, 1
      %p131 = scmp.ne.s32.totalorder %s126, %s128
      %p132 = scmp.eq.s32.totalorder %s29, 0
      %p133 = por %p131, %p132
      %p134 = scmp.ne.s32.totalorder %s126, %s128
      %p135 = scmp.eq.s32.totalorder %s34, 1
      %p136 = por %p134, %p135
      %p137 = scmp.ne.s32.totalorder %s128, %s129
      %p138 = scmp.eq.s32.totalorder %s34, 0
      %p139 = por %p137, %p138
      %p140 = scmp.ne.s32.totalorder %s128, %s129
      %p141 = scmp.eq.s32.totalorder %s35, 1
      %p142 = por %p140, %p141
      %p144 = scmp.ne.s32.totalorder %s129, %s143
      %p145 = scmp.eq.s32.totalorder %s35, 0
      %p146 = por %p144, %p145
      %s148 = sadd.s32 %s147, 1
      %p151 = scmp.eq.s32.totalorder %s29, 1
      %p152 = scmp.ne.s32.totalorder %s147, %s149
      %p153 = scmp.eq.s32.totalorder %s29, 0
      %p154 = por %p152, %p153
      %p155 = scmp.ne.s32.totalorder %s147, %s149
      %p156 = scmp.eq.s32.totalorder %s34, 1
      %p157 = por %p155, %p156
      %p158 = scmp.ne.s32.totalorder %s149, %s150
      %p159 = scmp.eq.s32.totalorder %s34, 0
      %p160 = por %p158, %p159
      %p161 = scmp.ne.s32.totalorder %s149, %s150
      %p162 = scmp.eq.s32.totalorder %s35, 1
      %p163 = por %p161, %p162
      %p165 = scmp.ne.s32.totalorder %s150, %s164
      %p166 = scmp.eq.s32.totalorder %s35, 0
      %p167 = por %p165, %p166
      %s169 = sadd.s32 %s168, 1
      %p172 = scmp.eq.s32.totalorder %s29, 1
      %p173 = scmp.ne.s32.totalorder %s168, %s170
      %p174 = scmp.eq.s32.totalorder %s29, 0
      %p175 = por %p173, %p174
      %p176 = scmp.ne.s32.totalorder %s168, %s170
      %p177 = scmp.eq.s32.totalorder %s34, 1
      %p178 = por %p176, %p177
      %p179 = scmp.ne.s32.totalorder %s170, %s171
      %p180 = scmp.eq.s32.totalorder %s34, 0
      %p181 = por %p179, %p180
      %p182 = scmp.ne.s32.totalorder %s170, %s171
      %p183 = scmp.eq.s32.totalorder %s35, 1
      %p184 = por %p182, %p183
      %p186 = scmp.ne.s32.totalorder %s171, %s185
      %p187 = scmp.eq.s32.totalorder %s35, 0
      %p188 = por %p186, %p187
      %s190 = sadd.s32 %s189, 1
      %p193 = scmp.eq.s32.totalorder %s29, 1
      %p194 = scmp.ne.s32.totalorder %s189, %s191
      %p195 = scmp.eq.s32.totalorder %s29, 0
      %p196 = por %p194, %p195
      %p197 = scmp.ne.s32.totalorder %s189, %s191
      %p198 = scmp.eq.s32.totalorder %s34, 1
      %p199 = por %p197, %p198
      %p200 = scmp.ne.s32.totalorder %s191, %s192
      %p201 = scmp.eq.s32.totalorder %s34, 0
      %p202 = por %p200, %p201
      %p203 = scmp.ne.s32.totalorder %s191, %s192
      %p204 = scmp.eq.s32.totalorder %s35, 1
      %p205 = por %p203, %p204
      %p207 = scmp.ne.s32.totalorder %s192, %s206
      %p208 = scmp.eq.s32.totalorder %s35, 0
      %p209 = por %p207, %p208
      %s211 = sadd.s32 %s210, 1
      %p214 = scmp.eq.s32.totalorder %s29, 1
      %p215 = scmp.ne.s32.totalorder %s210, %s212
      %p216 = scmp.eq.s32.totalorder %s29, 0
      %p217 = por %p215, %p216
      %p218 = scmp.ne.s32.totalorder %s210, %s212
      %p219 = scmp.eq.s32.totalorder %s34, 1
      %p220 = por %p218, %p219
      %p221 = scmp.ne.s32.totalorder %s212, %s213
      %p222 = scmp.eq.s32.totalorder %s34, 0
      %p223 = por %p221, %p222
      %p224 = scmp.ne.s32.totalorder %s212, %s213
      %p225 = scmp.eq.s32.totalorder %s35, 1
      %p226 = por %p224, %p225
      %p228 = scmp.ne.s32.totalorder %s213, %s227
      %p229 = scmp.eq.s32.totalorder %s35, 0
      %p230 = por %p228, %p229
      %s232 = sadd.s32 %s231, 1
      %p235 = scmp.eq.s32.totalorder %s29, 1
      %p236 = scmp.ne.s32.totalorder %s231, %s233
      %p237 = scmp.eq.s32.totalorder %s29, 0
      %p238 = por %p236, %p237
      %p239 = scmp.ne.s32.totalorder %s231, %s233
      %p240 = scmp.eq.s32.totalorder %s34, 1
      %p241 = por %p239, %p240
      %p242 = scmp.ne.s32.totalorder %s233, %s234
      %p243 = scmp.eq.s32.totalorder %s34, 0
      %p244 = por %p242, %p243
      %p245 = scmp.ne.s32.totalorder %s233, %s234
      %p246 = scmp.eq.s32.totalorder %s35, 1
      %p247 = por %p245, %p246
      %p249 = scmp.ne.s32.totalorder %s234, %s248
      %p250 = scmp.eq.s32.totalorder %s35, 0
      %p251 = por %p249, %p250
      %s253 = sadd.s32 %s252, 1
      %p256 = scmp.eq.s32.totalorder %s29, 1
      %p257 = scmp.ne.s32.totalorder %s252, %s254
      %p258 = scmp.eq.s32.totalorder %s29, 0
      %p259 = por %p257, %p258
      %p260 = scmp.ne.s32.totalorder %s252, %s254
      %p261 = scmp.eq.s32.totalorder %s34, 1
      %p262 = por %p260, %p261
      %p263 = scmp.ne.s32.totalorder %s254, %s255
      %p264 = scmp.eq.s32.totalorder %s34, 0
      %p265 = por %p263, %p264
      %p266 = scmp.ne.s32.totalorder %s254, %s255
      %p267 = scmp.eq.s32.totalorder %s35, 1
      %p268 = por %p266, %p267
      %p270 = scmp.ne.s32.totalorder %s255, %s269
      %p271 = scmp.eq.s32.totalorder %s35, 0
      %p272 = por %p270, %p271
      %s274 = sadd.s32 %s273, 1
      %p277 = scmp.eq.s32.totalorder %s29, 1
      %p278 = scmp.ne.s32.totalorder %s273, %s275
      %p279 = scmp.eq.s32.totalorder %s29, 0
      %p280 = por %p278, %p279
      %p281 = scmp.ne.s32.totalorder %s273, %s275
      %p282 = scmp.eq.s32.totalorder %s34, 1
      %p283 = por %p281, %p282
      %p284 = scmp.ne.s32.totalorder %s275, %s276
      %p285 = scmp.eq.s32.totalorder %s34, 0
      %p286 = por %p284, %p285
      %p287 = scmp.ne.s32.totalorder %s275, %s276
      %p288 = scmp.eq.s32.totalorder %s35, 1
      %p289 = por %p287, %p288
      %p291 = scmp.ne.s32.totalorder %s276, %s290
      %p292 = scmp.eq.s32.totalorder %s35, 0
      %p293 = por %p291, %p292
      %s295 = sadd.s32 %s294, 1
      %p298 = scmp.eq.s32.totalorder %s29, 1
      %p299 = scmp.ne.s32.totalorder %s294, %s296
      %p300 = scmp.eq.s32.totalorder %s29, 0
      %p301 = por %p299, %p300
      %p302 = scmp.ne.s32.totalorder %s294, %s296
      %p303 = scmp.eq.s32.totalorder %s34, 1
      %p304 = por %p302, %p303
      %p305 = scmp.ne.s32.totalorder %s296, %s297
      %p306 = scmp.eq.s32.totalorder %s34, 0
      %p307 = por %p305, %p306
      %p308 = scmp.ne.s32.totalorder %s296, %s297
      %p309 = scmp.eq.s32.totalorder %s35, 1
      %p310 = por %p308, %p309
      %p312 = scmp.ne.s32.totalorder %s297, %s311
      %p313 = scmp.eq.s32.totalorder %s35, 0
      %p314 = por %p312, %p313
      %s316 = sadd.s32 %s315, 1
      %p319 = scmp.eq.s32.totalorder %s29, 1
      %p320 = scmp.ne.s32.totalorder %s315, %s317
      %p321 = scmp.eq.s32.totalorder %s29, 0
      %p322 = por %p320, %p321
      %p323 = scmp.ne.s32.totalorder %s315, %s317
      %p324 = scmp.eq.s32.totalorder %s34, 1
      %p325 = por %p323, %p324
      %p326 = scmp.ne.s32.totalorder %s317, %s318
      %p327 = scmp.eq.s32.totalorder %s34, 0
      %p328 = por %p326, %p327
      %p329 = scmp.ne.s32.totalorder %s317, %s318
      %p330 = scmp.eq.s32.totalorder %s35, 1
      %p331 = por %p329, %p330
      %p333 = scmp.ne.s32.totalorder %s318, %s332
      %p334 = scmp.eq.s32.totalorder %s35, 0
      %p335 = por %p333, %p334
      %s337 = sadd.s32 %s336, 1
      %p340 = scmp.eq.s32.totalorder %s29, 1
      %p341 = scmp.ne.s32.totalorder %s336, %s338
      %p342 = scmp.eq.s32.totalorder %s29, 0
      %p343 = por %p341, %p342
      %p344 = scmp.ne.s32.totalorder %s336, %s338
      %p345 = scmp.eq.s32.totalorder %s34, 1
      %p346 = por %p344, %p345
      %p347 = scmp.ne.s32.totalorder %s338, %s339
      %p348 = scmp.eq.s32.totalorder %s34, 0
      %p349 = por %p347, %p348
      %p350 = scmp.ne.s32.totalorder %s338, %s339
      %p351 = scmp.eq.s32.totalorder %s35, 1
      %p352 = por %p350, %p351
      %p354 = scmp.ne.s32.totalorder %s339, %s353
      %p355 = scmp.eq.s32.totalorder %s35, 0
      %p356 = por %p354, %p355
      %s358 = sadd.s32 %s357, 1
      %p361 = scmp.eq.s32.totalorder %s29, 1
      %p362 = scmp.ne.s32.totalorder %s357, %s359
      %p363 = scmp.eq.s32.totalorder %s29, 0
      %p364 = por %p362, %p363
      %p365 = scmp.ne.s32.totalorder %s357, %s359
      %p366 = scmp.eq.s32.totalorder %s34, 1
      %p367 = por %p365, %p366
      %p368 = scmp.ne.s32.totalorder %s359, %s360
      %p369 = scmp.eq.s32.totalorder %s34, 0
      %p370 = por %p368, %p369
      %p371 = scmp.ne.s32.totalorder %s359, %s360
      %p372 = scmp.eq.s32.totalorder %s35, 1
      %p373 = por %p371, %p372
      %p375 = scmp.ne.s32.totalorder %s360, %s374
      %p376 = scmp.eq.s32.totalorder %s35, 0
      %p377 = por %p375, %p376
      %s379 = sadd.s32 %s378, 1
      %p382 = scmp.eq.s32.totalorder %s29, 1
      %p383 = scmp.ne.s32.totalorder %s378, %s380
      %p384 = scmp.eq.s32.totalorder %s29, 0
      %p385 = por %p383, %p384
      %p386 = scmp.ne.s32.totalorder %s378, %s380
      %p387 = scmp.eq.s32.totalorder %s34, 1
      %p388 = por %p386, %p387
      %p389 = scmp.ne.s32.totalorder %s380, %s381
      %p390 = scmp.eq.s32.totalorder %s34, 0
      %p391 = por %p389, %p390
      %p392 = scmp.ne.s32.totalorder %s380, %s381
      %p393 = scmp.eq.s32.totalorder %s35, 1
      %p394 = por %p392, %p393
      %p396 = scmp.ne.s32.totalorder %s381, %s395
      %p397 = scmp.eq.s32.totalorder %s35, 0
      %p398 = por %p396, %p397
      %s399 = ssub.s32 %s29, %s36
      %p400 = scmp.eq.s32.totalorder %s399, 0
      %s402 = sadd.s32 %s401, 1
      %s403 = scalar_select %p400, %s401, %s402
      %p406 = pneg %p400
      %p407 = scmp.eq.s32.totalorder %s29, 1
      %p408 = por %p406, %p407
      %p409 = scmp.ne.s32.totalorder %s401, %s404
      %p410 = scmp.eq.s32.totalorder %s29, 0
      %p411 = por %p409, %p410
      %p412 = scmp.ne.s32.totalorder %s401, %s404
      %p413 = scmp.eq.s32.totalorder %s34, 1
      %p414 = por %p412, %p413
      %p415 = scmp.ne.s32.totalorder %s404, %s405
      %p416 = scmp.eq.s32.totalorder %s34, 0
      %p417 = por %p415, %p416
      %p418 = scmp.ne.s32.totalorder %s404, %s405
      %p419 = scmp.eq.s32.totalorder %s35, 1
      %p420 = por %p418, %p419
      %p422 = scmp.ne.s32.totalorder %s405, %s421
      %p423 = scmp.eq.s32.totalorder %s35, 0
      %p424 = por %p422, %p423
      %p425 = scmp.le.s32.totalorder 1, %s29
      %p426 = scmp.lt.s32.totalorder %s29, 3
      %p427 = pnand %p425, %p426
      %p428 = pneg %p427
      // Predicated region
      $region9: #{tpu_custom_call.1} parent=5 // pred_check
        _
      $region10: #{tpu_custom_call.1} parent=5 // pred_check_branch
        %430 = sbr.rel (%p427) target = $region12
      $region11: #{tpu_custom_call.1} parent=5 // pred_region
        %s431 = ssub.s32 %s29, 1
        // Predicated region
        $region13: #{tpu_custom_call.1} parent=11 // pred_check
          %p432 = pneg %p76
        $region14: #{tpu_custom_call.1} parent=11 // pred_check_branch
          %434 = sbr.rel (%p432) target = $region16
        $region15: #{tpu_custom_call.1} parent=11 // pred_region
          _
        $region16: #{tpu_custom_call.1} parent=11 // pred_fallthru
          _
        // Predicated region
        $region17: #{tpu_custom_call.1} parent=11 // pred_check
          %p435 = pneg %p97
        $region18: #{tpu_custom_call.1} parent=11 // pred_check_branch
          %437 = sbr.rel (%p435) target = $region20
        $region19: #{tpu_custom_call.1} parent=11 // pred_region
          _
        $region20: #{tpu_custom_call.1} parent=11 // pred_fallthru
          _
        // Predicated region
        $region21: #{tpu_custom_call.1} parent=11 // pred_check
          %p438 = pneg %p118
        $region22: #{tpu_custom_call.1} parent=11 // pred_check_branch
          %440 = sbr.rel (%p438) target = $region24
        $region23: #{tpu_custom_call.1} parent=11 // pred_region
          _
        $region24: #{tpu_custom_call.1} parent=11 // pred_fallthru
          _
        // Predicated region
        $region25: #{tpu_custom_call.1} parent=11 // pred_check
          %p441 = pneg %p139
        $region26: #{tpu_custom_call.1} parent=11 // pred_check_branch
          %443 = sbr.rel (%p441) target = $region28
        $region27: #{tpu_custom_call.1} parent=11 // pred_region
          _
        $region28: #{tpu_custom_call.1} parent=11 // pred_fallthru
          _
        // Predicated region
        $region29: #{tpu_custom_call.1} parent=11 // pred_check
          %p444 = pneg %p160
        $region30: #{tpu_custom_call.1} parent=11 // pred_check_branch
          %446 = sbr.rel (%p444) target = $region32
        $region31: #{tpu_custom_call.1} parent=11 // pred_region
          _
        $region32: #{tpu_custom_call.1} parent=11 // pred_fallthru
          _
        // Predicated region
        $region33: #{tpu_custom_call.1} parent=11 // pred_check
          %p447 = pneg %p181
        $region34: #{tpu_custom_call.1} parent=11 // pred_check_branch
          %449 = sbr.rel (%p447) target = $region36
        $region35: #{tpu_custom_call.1} parent=11 // pred_region
          _
        $region36: #{tpu_custom_call.1} parent=11 // pred_fallthru
          _
        // Predicated region
        $region37: #{tpu_custom_call.1} parent=11 // pred_check
          %p450 = pneg %p202
        $region38: #{tpu_custom_call.1} parent=11 // pred_check_branch
          %452 = sbr.rel (%p450) target = $region40
        $region39: #{tpu_custom_call.1} parent=11 // pred_region
          _
        $region40: #{tpu_custom_call.1} parent=11 // pred_fallthru
          _
        // Predicated region
        $region41: #{tpu_custom_call.1} parent=11 // pred_check
          %p453 = pneg %p223
        $region42: #{tpu_custom_call.1} parent=11 // pred_check_branch
          %455 = sbr.rel (%p453) target = $region44
        $region43: #{tpu_custom_call.1} parent=11 // pred_region
          _
        $region44: #{tpu_custom_call.1} parent=11 // pred_fallthru
          _
        // Predicated region
        $region45: #{tpu_custom_call.1} parent=11 // pred_check
          %p456 = pneg %p244
        $region46: #{tpu_custom_call.1} parent=11 // pred_check_branch
          %458 = sbr.rel (%p456) target = $region48
        $region47: #{tpu_custom_call.1} parent=11 // pred_region
          _
        $region48: #{tpu_custom_call.1} parent=11 // pred_fallthru
          _
        // Predicated region
        $region49: #{tpu_custom_call.1} parent=11 // pred_check
          %p459 = pneg %p265
        $region50: #{tpu_custom_call.1} parent=11 // pred_check_branch
          %461 = sbr.rel (%p459) target = $region52
        $region51: #{tpu_custom_call.1} parent=11 // pred_region
          _
        $region52: #{tpu_custom_call.1} parent=11 // pred_fallthru
          _
        // Predicated region
        $region53: #{tpu_custom_call.1} parent=11 // pred_check
          %p462 = pneg %p286
        $region54: #{tpu_custom_call.1} parent=11 // pred_check_branch
          %464 = sbr.rel (%p462) target = $region56
        $region55: #{tpu_custom_call.1} parent=11 // pred_region
          _
        $region56: #{tpu_custom_call.1} parent=11 // pred_fallthru
          _
        // Predicated region
        $region57: #{tpu_custom_call.1} parent=11 // pred_check
          %p465 = pneg %p307
        $region58: #{tpu_custom_call.1} parent=11 // pred_check_branch
          %467 = sbr.rel (%p465) target = $region60
        $region59: #{tpu_custom_call.1} parent=11 // pred_region
          _
        $region60: #{tpu_custom_call.1} parent=11 // pred_fallthru
          _
        // Predicated region
        $region61: #{tpu_custom_call.1} parent=11 // pred_check
          %p468 = pneg %p328
        $region62: #{tpu_custom_call.1} parent=11 // pred_check_branch
          %470 = sbr.rel (%p468) target = $region64
        $region63: #{tpu_custom_call.1} parent=11 // pred_region
          _
        $region64: #{tpu_custom_call.1} parent=11 // pred_fallthru
          _
        // Predicated region
        $region65: #{tpu_custom_call.1} parent=11 // pred_check
          %p471 = pneg %p349
        $region66: #{tpu_custom_call.1} parent=11 // pred_check_branch
          %473 = sbr.rel (%p471) target = $region68
        $region67: #{tpu_custom_call.1} parent=11 // pred_region
          _
        $region68: #{tpu_custom_call.1} parent=11 // pred_fallthru
          _
        // Predicated region
        $region69: #{tpu_custom_call.1} parent=11 // pred_check
          %p474 = pneg %p370
        $region70: #{tpu_custom_call.1} parent=11 // pred_check_branch
          %476 = sbr.rel (%p474) target = $region72
        $region71: #{tpu_custom_call.1} parent=11 // pred_region
          _
        $region72: #{tpu_custom_call.1} parent=11 // pred_fallthru
          _
        // Predicated region
        $region73: #{tpu_custom_call.1} parent=11 // pred_check
          %p477 = pneg %p391
        $region74: #{tpu_custom_call.1} parent=11 // pred_check_branch
          %479 = sbr.rel (%p477) target = $region76
        $region75: #{tpu_custom_call.1} parent=11 // pred_region
          _
        $region76: #{tpu_custom_call.1} parent=11 // pred_fallthru
          _
      $region12: #{tpu_custom_call.1} parent=5 // pred_fallthru
        _
      %p480 = scmp.lt.s32.totalorder %s29, 2
      // Predicated region
      $region77: #{tpu_custom_call.1} parent=5 // pred_check
        %p481 = pneg %p480
      $region78: #{tpu_custom_call.1} parent=5 // pred_check_branch
        %483 = sbr.rel (%p481) target = $region80
      $region79: #{tpu_custom_call.1} parent=5 // pred_region
        // Predicated region
        $region81: #{tpu_custom_call.1} parent=79 // pred_check
          %p484 = pneg %p49
        $region82: #{tpu_custom_call.1} parent=79 // pred_check_branch
          %486 = sbr.rel (%p484) target = $region84
        $region83: #{tpu_custom_call.1} parent=79 // pred_region
          %s487 = sand.u32 %s39, 1
          %s488 = scalar_lea.sflag [#allocation3], %s487
          %s489 = sand.u32 %s39, 1
          %s490 = smul.addr %s489, 256
          %s491 = scalar_lea.vmem [#allocation2], %s490
          %s492 = smul.u32 32, %s29
          %s494 = ssub.s32 4096, 4096
          %495 = vsyncadd %s488, %s494
          %s496 = smul.addr %s492, 128
          %s497 = scalar_lea.hbm %s0, %s496
          %s498 = sshll.u32 %s491, 4
          %s499 = int_to_ptr.vmem [resolvable:$true] %s498
          %504 = dma.hbm_to_vmem [thread:$0]  %s497, 4096, %s499, %s488, 128, 128, 8
        $region84: #{tpu_custom_call.1} parent=79 // pred_fallthru
          _
      $region80: #{tpu_custom_call.1} parent=5 // pred_fallthru
        _
      %p505 = scmp.le.s32.totalorder 1, %s29
      %p506 = scmp.lt.s32.totalorder %s29, 3
      %p507 = pnand %p505, %p506
      %p508 = pneg %p507
      // Predicated region
      $region85: #{tpu_custom_call.1} parent=5 // pred_check
        _
      $region86: #{tpu_custom_call.1} parent=5 // pred_check_branch
        %510 = sbr.rel (%p507) target = $region88
      $region87: #{tpu_custom_call.1} parent=5 // pred_region
        %s511 = ssub.s32 %s29, 1
        %s512 = sand.u32 %s42, 1
        %s513 = scalar_lea.sflag [#allocation3], %s512
        %s514 = sand.u32 %s42, 1
        %s515 = smul.addr %s514, 256
        %s516 = scalar_lea.vmem [#allocation2], %s515
        // Predicated region
        $region89: #{tpu_custom_call.1} parent=87 // pred_check
          %p517 = pneg %p55
        $region90: #{tpu_custom_call.1} parent=87 // pred_check_branch
          %519 = sbr.rel (%p517) target = $region92
        $region91: #{tpu_custom_call.1} parent=87 // pred_region
          %520 = dma.done %s513, 4096
        $region92: #{tpu_custom_call.1} parent=87 // pred_fallthru
          _
        %s521 = sand.u32 %s42, 1
        %s522 = scalar_lea.sflag [#allocation3], %s521
        %s523 = sand.u32 %s42, 1
        %s524 = smul.addr %s523, 256
        %s525 = scalar_lea.vmem [#allocation2], %s524
        %p526 = pneg %p55
        %p527 = pneg %p52
        %p528 = pneg %p76
        %p529 = pneg %p73
        %p530 = pneg %p97
        %p531 = pneg %p94
        %p532 = pneg %p118
        %p533 = pneg %p115
        %p534 = pneg %p139
        %p535 = pneg %p136
        %p536 = pneg %p160
        %p537 = pneg %p157
        %p538 = pneg %p181
        %p539 = pneg %p178
        %p540 = pneg %p202
        %p541 = pneg %p199
        %p542 = pneg %p223
        %p543 = pneg %p220
        %p544 = pneg %p244
        %p545 = pneg %p241
        %p546 = pneg %p265
        %p547 = pneg %p262
        %p548 = pneg %p286
        %p549 = pneg %p283
        %p550 = pneg %p307
        %p551 = pneg %p304
        %p552 = pneg %p328
        %p553 = pneg %p325
        %p554 = pneg %p349
        %p555 = pneg %p346
        %p556 = pneg %p370
        %p557 = pneg %p367
        %p558 = pneg %p391
        %p559 = pneg %p388
        %p560 = pneg %p417
        %p561 = pneg %p414
        %s562 = sand.u32 %s404, 1
        %s563 = scalar_lea.sflag [#allocation4], %s562
        %s564 = sand.u32 %s404, 1
        %s565 = smul.addr %s564, 256
        %s566 = scalar_lea.vmem [#allocation5], %s565
        %s567 = smul.u32 32, %s34
        %s568 = smul.u32 32, %s34
        %v570 = vld [vmem:[%s516] sm:$0xff]
        %v571 = vld [vmem:[%s516 + $0x8] sm:$0xff]
        %v572 = vld [vmem:[%s516 + $0x10] sm:$0xff]
        %v573 = vld [vmem:[%s516 + $0x18] sm:$0xff]
        %v574 = vld [vmem:[%s516 + $0x20] sm:$0xff]
        %v575 = vld [vmem:[%s516 + $0x28] sm:$0xff]
        %v576 = vld [vmem:[%s516 + $0x30] sm:$0xff]
        %v577 = vld [vmem:[%s516 + $0x38] sm:$0xff]
        %v578 = vld [vmem:[%s516 + $0x40] sm:$0xff]
        %v579 = vld [vmem:[%s516 + $0x48] sm:$0xff]
        %v580 = vld [vmem:[%s516 + $0x50] sm:$0xff]
        %v581 = vld [vmem:[%s516 + $0x58] sm:$0xff]
        %v582 = vld [vmem:[%s516 + $0x60] sm:$0xff]
        %v583 = vld [vmem:[%s516 + $0x68] sm:$0xff]
        %v584 = vld [vmem:[%s516 + $0x70] sm:$0xff]
        %v585 = vld [vmem:[%s516 + $0x78] sm:$0xff]
        %v586 = vld [vmem:[%s516 + $0x80] sm:$0xff]
        %v587 = vld [vmem:[%s516 + $0x88] sm:$0xff]
        %v588 = vld [vmem:[%s516 + $0x90] sm:$0xff]
        %v589 = vld [vmem:[%s516 + $0x98] sm:$0xff]
        %v590 = vld [vmem:[%s516 + $0xa0] sm:$0xff]
        %v591 = vld [vmem:[%s516 + $0xa8] sm:$0xff]
        %v592 = vld [vmem:[%s516 + $0xb0] sm:$0xff]
        %v593 = vld [vmem:[%s516 + $0xb8] sm:$0xff]
        %v594 = vld [vmem:[%s516 + $0xc0] sm:$0xff]
        %v595 = vld [vmem:[%s516 + $0xc8] sm:$0xff]
        %v596 = vld [vmem:[%s516 + $0xd0] sm:$0xff]
        %v597 = vld [vmem:[%s516 + $0xd8] sm:$0xff]
        %v598 = vld [vmem:[%s516 + $0xe0] sm:$0xff]
        %v599 = vld [vmem:[%s516 + $0xe8] sm:$0xff]
        %v600 = vld [vmem:[%s516 + $0xf0] sm:$0xff]
        %v601 = vld [vmem:[%s516 + $0xf8] sm:$0xff]
        %v602 = vpack.c.bf16 %v571, %v570
        %v603 = vpack.c.bf16 %v573, %v572
        %v604 = vpack.c.bf16 %v575, %v574
        %v605 = vpack.c.bf16 %v577, %v576
        %v606 = vpack.c.bf16 %v579, %v578
        %v607 = vpack.c.bf16 %v581, %v580
        %v608 = vpack.c.bf16 %v583, %v582
        %v609 = vpack.c.bf16 %v585, %v584
        %v610 = vpack.c.bf16 %v587, %v586
        %v611 = vpack.c.bf16 %v589, %v588
        %v612 = vpack.c.bf16 %v591, %v590
        %v613 = vpack.c.bf16 %v593, %v592
        %v614 = vpack.c.bf16 %v595, %v594
        %v615 = vpack.c.bf16 %v597, %v596
        %v616 = vpack.c.bf16 %v599, %v598
        %v617 = vpack.c.bf16 %v601, %v600
        %v618 = vld [vmem:[%s1] sm:$0xf]
        %v619 = vld [vmem:[%s1 + $0x4] sm:$0xf]
        %v620 = vld [vmem:[%s1 + $0x8] sm:$0xf]
        %v621 = vld [vmem:[%s1 + $0xc] sm:$0xf]
        %v622 = vld [vmem:[%s1 + $0x10] sm:$0xf]
        %v623 = vld [vmem:[%s1 + $0x14] sm:$0xf]
        %v624 = vld [vmem:[%s1 + $0x18] sm:$0xf]
        %v625 = vld [vmem:[%s1 + $0x1c] sm:$0xf]
        %v626 = vld [vmem:[%s1 + $0x20] sm:$0xf]
        %v627 = vld [vmem:[%s1 + $0x24] sm:$0xf]
        %v628 = vld [vmem:[%s1 + $0x28] sm:$0xf]
        %v629 = vld [vmem:[%s1 + $0x2c] sm:$0xf]
        %v630 = vld [vmem:[%s1 + $0x30] sm:$0xf]
        %v631 = vld [vmem:[%s1 + $0x34] sm:$0xf]
        %v632 = vld [vmem:[%s1 + $0x38] sm:$0xf]
        %v633 = vld [vmem:[%s1 + $0x3c] sm:$0xf]
        %v634 = vld [vmem:[%s2] sm:$0x1]
        %v636 = vlaneseq
        %v637 = vshrl.u32 %v636, 7
        %v638 = vsub.s32 0, %v637
        %v639 = vrot.slane %v634, %v638
        %v657 = vunpack.c.l.b16 %v618
        %v658 = vunpack.c.l.b16 %v619
        %v659 = vunpack.c.l.b16 %v620
        %v660 = vunpack.c.l.b16 %v621
        %v661 = vunpack.c.l.b16 %v622
        %v662 = vunpack.c.l.b16 %v623
        %v663 = vunpack.c.l.b16 %v624
        %v664 = vunpack.c.l.b16 %v625
        %v665 = vunpack.c.l.b16 %v626
        %v666 = vunpack.c.l.b16 %v627
        %v667 = vunpack.c.l.b16 %v628
        %v668 = vunpack.c.l.b16 %v629
        %v669 = vunpack.c.l.b16 %v630
        %v670 = vunpack.c.l.b16 %v631
        %v671 = vunpack.c.l.b16 %v632
        %v672 = vunpack.c.l.b16 %v633
        %v673 = vpack.c.b16 %v658, %v657
        %v674 = vpack.c.b16 %v660, %v659
        %v675 = vpack.c.b16 %v662, %v661
        %v676 = vpack.c.b16 %v664, %v663
        %v677 = vpack.c.b16 %v666, %v665
        %v678 = vpack.c.b16 %v668, %v667
        %v679 = vpack.c.b16 %v670, %v669
        %v680 = vpack.c.b16 %v672, %v671
        %689 = vmatprep.subr.bf16.mxu0 0
        %690 = vmatpush1.bf16.msra.mxu0 %v673
        %691 = vmatprep.subr.bf16.mxu0 0
        %692 = vmatpush1.bf16.msra.mxu0 %v674
        %693 = vmatprep.subr.bf16.mxu0 0
        %694 = vmatpush1.bf16.msra.mxu0 %v675
        %695 = vmatprep.subr.bf16.mxu0 0
        %696 = vmatpush1.bf16.msra.mxu0 %v676
        %697 = vmatprep.subr.bf16.mxu0 0
        %698 = vmatpush1.bf16.msra.mxu0 %v677
        %699 = vmatprep.subr.bf16.mxu0 0
        %700 = vmatpush1.bf16.msra.mxu0 %v678
        %701 = vmatprep.subr.bf16.mxu0 0
        %702 = vmatpush1.bf16.msra.mxu0 %v679
        %703 = vmatprep.subr.bf16.mxu0 0
        %704 = vmatpush1.bf16.msra.mxu0 %v680
        %705 = vmatprep.subr.bf16.mxu0 0
        %706 = vmatpush1.bf16.msra.mxu0 0
        %707 = vmatprep.subr.bf16.mxu0 0
        %708 = vmatpush1.bf16.msra.mxu0 0
        %709 = vmatprep.subr.bf16.mxu0 0
        %710 = vmatpush1.bf16.msra.mxu0 0
        %711 = vmatprep.subr.bf16.mxu0 0
        %712 = vmatpush1.bf16.msra.mxu0 0
        %713 = vmatprep.subr.bf16.mxu0 0
        %714 = vmatpush1.bf16.msra.mxu0 0
        %715 = vmatprep.subr.bf16.mxu0 0
        %716 = vmatpush1.bf16.msra.mxu0 0
        %717 = vmatprep.subr.bf16.mxu0 0
        %718 = vmatpush1.bf16.msra.mxu0 0
        %719 = vmatprep.subr.bf16.mxu0 0
        %720 = vmatpush1.bf16.msra.mxu0 0
        %721 = vmatprep.mubr.bf16.mxu0 0
        %722 = vmatmul.mubr.bf16.gmra.mrb[0].mxu0 %v602
        %v723 = vpop.f32.mrb[0].mxu0
        %v724 = vadd.f32 %v639, %v723
        %v725 = vpop.f32.mrb[0].mxu0
        %v726 = vpop.f32.mrb[0].mxu0
        %v727 = vadd.f32 %v639, %v726
        %v728 = vpop.f32.mrb[0].mxu0
        %729 = vmatprep.mubr.bf16.mxu0 0
        %730 = vmatmul.mubr.bf16.gmra.mrb[0].mxu0 %v603
        %v731 = vpop.f32.mrb[0].mxu0
        %v732 = vadd.f32 %v639, %v731
        %v733 = vpop.f32.mrb[0].mxu0
        %v734 = vpop.f32.mrb[0].mxu0
        %v735 = vadd.f32 %v639, %v734
        %v736 = vpop.f32.mrb[0].mxu0
        %737 = vmatprep.mubr.bf16.mxu0 0
        %738 = vmatmul.mubr.bf16.gmra.mrb[0].mxu0 %v604
        %v739 = vpop.f32.mrb[0].mxu0
        %v740 = vadd.f32 %v639, %v739
        %v741 = vpop.f32.mrb[0].mxu0
        %v742 = vpop.f32.mrb[0].mxu0
        %v743 = vadd.f32 %v639, %v742
        %v744 = vpop.f32.mrb[0].mxu0
        %745 = vmatprep.mubr.bf16.mxu0 0
        %746 = vmatmul.mubr.bf16.gmra.mrb[0].mxu0 %v605
        %v747 = vpop.f32.mrb[0].mxu0
        %v748 = vadd.f32 %v639, %v747
        %v749 = vpop.f32.mrb[0].mxu0
        %v750 = vpop.f32.mrb[0].mxu0
        %v751 = vadd.f32 %v639, %v750
        %v752 = vpop.f32.mrb[0].mxu0
        %753 = vmatprep.mubr.bf16.mxu0 0
        %754 = vmatmul.mubr.bf16.gmra.mrb[0].mxu0 %v606
        %v755 = vpop.f32.mrb[0].mxu0
        %v756 = vadd.f32 %v639, %v755
        %v757 = vpop.f32.mrb[0].mxu0
        %v758 = vpop.f32.mrb[0].mxu0
        %v759 = vadd.f32 %v639, %v758
        %v760 = vpop.f32.mrb[0].mxu0
        %761 = vmatprep.mubr.bf16.mxu0 0
        %762 = vmatmul.mubr.bf16.gmra.mrb[0].mxu0 %v607
        %v763 = vpop.f32.mrb[0].mxu0
        %v764 = vadd.f32 %v639, %v763
        %v765 = vpop.f32.mrb[0].mxu0
        %v766 = vpop.f32.mrb[0].mxu0
        %v767 = vadd.f32 %v639, %v766
        %v768 = vpop.f32.mrb[0].mxu0
        %769 = vmatprep.mubr.bf16.mxu0 0
        %770 = vmatmul.mubr.bf16.gmra.mrb[0].mxu0 %v608
        %v771 = vpop.f32.mrb[0].mxu0
        %v772 = vadd.f32 %v639, %v771
        %v773 = vpop.f32.mrb[0].mxu0
        %v774 = vpop.f32.mrb[0].mxu0
        %v775 = vadd.f32 %v639, %v774
        %v776 = vpop.f32.mrb[0].mxu0
        %777 = vmatprep.mubr.bf16.mxu0 0
        %778 = vmatmul.mubr.bf16.gmra.mrb[0].mxu0 %v609
        %v779 = vpop.f32.mrb[0].mxu0
        %v780 = vadd.f32 %v639, %v779
        %v781 = vpop.f32.mrb[0].mxu0
        %v782 = vpop.f32.mrb[0].mxu0
        %v783 = vadd.f32 %v639, %v782
        %v784 = vpop.f32.mrb[0].mxu0
        %785 = vmatprep.mubr.bf16.mxu0 0
        %786 = vmatmul.mubr.bf16.gmra.mrb[0].mxu0 %v610
        %v787 = vpop.f32.mrb[0].mxu0
        %v788 = vadd.f32 %v639, %v787
        %v789 = vpop.f32.mrb[0].mxu0
        %v790 = vpop.f32.mrb[0].mxu0
        %v791 = vadd.f32 %v639, %v790
        %v792 = vpop.f32.mrb[0].mxu0
        %793 = vmatprep.mubr.bf16.mxu0 0
        %794 = vmatmul.mubr.bf16.gmra.mrb[0].mxu0 %v611
        %v795 = vpop.f32.mrb[0].mxu0
        %v796 = vadd.f32 %v639, %v795
        %v797 = vpop.f32.mrb[0].mxu0
        %v798 = vpop.f32.mrb[0].mxu0
        %v799 = vadd.f32 %v639, %v798
        %v800 = vpop.f32.mrb[0].mxu0
        %801 = vmatprep.mubr.bf16.mxu0 0
        %802 = vmatmul.mubr.bf16.gmra.mrb[0].mxu0 %v612
        %v803 = vpop.f32.mrb[0].mxu0
        %v804 = vadd.f32 %v639, %v803
        %v805 = vpop.f32.mrb[0].mxu0
        %v806 = vpop.f32.mrb[0].mxu0
        %v807 = vadd.f32 %v639, %v806
        %v808 = vpop.f32.mrb[0].mxu0
        %809 = vmatprep.mubr.bf16.mxu0 0
        %810 = vmatmul.mubr.bf16.gmra.mrb[0].mxu0 %v613
        %v811 = vpop.f32.mrb[0].mxu0
        %v812 = vadd.f32 %v639, %v811
        %v813 = vpop.f32.mrb[0].mxu0
        %v814 = vpop.f32.mrb[0].mxu0
        %v815 = vadd.f32 %v639, %v814
        %v816 = vpop.f32.mrb[0].mxu0
        %817 = vmatprep.mubr.bf16.mxu0 0
        %818 = vmatmul.mubr.bf16.gmra.mrb[0].mxu0 %v614
        %v819 = vpop.f32.mrb[0].mxu0
        %v820 = vadd.f32 %v639, %v819
        %v821 = vpop.f32.mrb[0].mxu0
        %v822 = vpop.f32.mrb[0].mxu0
        %v823 = vadd.f32 %v639, %v822
        %v824 = vpop.f32.mrb[0].mxu0
        %825 = vmatprep.mubr.bf16.mxu0 0
        %826 = vmatmul.mubr.bf16.gmra.mrb[0].mxu0 %v615
        %v827 = vpop.f32.mrb[0].mxu0
        %v828 = vadd.f32 %v639, %v827
        %v829 = vpop.f32.mrb[0].mxu0
        %v830 = vpop.f32.mrb[0].mxu0
        %v831 = vadd.f32 %v639, %v830
        %v832 = vpop.f32.mrb[0].mxu0
        %833 = vmatprep.mubr.bf16.mxu0 0
        %834 = vmatmul.mubr.bf16.gmra.mrb[0].mxu0 %v616
        %v835 = vpop.f32.mrb[0].mxu0
        %v836 = vadd.f32 %v639, %v835
        %v837 = vpop.f32.mrb[0].mxu0
        %v838 = vpop.f32.mrb[0].mxu0
        %v839 = vadd.f32 %v639, %v838
        %v840 = vpop.f32.mrb[0].mxu0
        %841 = vmatprep.mubr.bf16.mxu0 0
        %842 = vmatmul.mubr.bf16.gmra.mrb[0].mxu0 %v617
        %v843 = vpop.f32.mrb[0].mxu0
        %v844 = vadd.f32 %v639, %v843
        %v845 = vpop.f32.mrb[0].mxu0
        %v846 = vpop.f32.mrb[0].mxu0
        %v847 = vadd.f32 %v639, %v846
        %v848 = vpop.f32.mrb[0].mxu0
        %849 = vdwg.mxu0
        %v850 = vmax.f32 %v724, 0.0
        %v851 = vmax.f32 %v727, 0.0
        %v852 = vmax.f32 %v732, 0.0
        %v853 = vmax.f32 %v735, 0.0
        %v854 = vmax.f32 %v740, 0.0
        %v855 = vmax.f32 %v743, 0.0
        %v856 = vmax.f32 %v748, 0.0
        %v857 = vmax.f32 %v751, 0.0
        %v858 = vmax.f32 %v756, 0.0
        %v859 = vmax.f32 %v759, 0.0
        %v860 = vmax.f32 %v764, 0.0
        %v861 = vmax.f32 %v767, 0.0
        %v862 = vmax.f32 %v772, 0.0
        %v863 = vmax.f32 %v775, 0.0
        %v864 = vmax.f32 %v780, 0.0
        %v865 = vmax.f32 %v783, 0.0
        %v866 = vmax.f32 %v788, 0.0
        %v867 = vmax.f32 %v791, 0.0
        %v868 = vmax.f32 %v796, 0.0
        %v869 = vmax.f32 %v799, 0.0
        %v870 = vmax.f32 %v804, 0.0
        %v871 = vmax.f32 %v807, 0.0
        %v872 = vmax.f32 %v812, 0.0
        %v873 = vmax.f32 %v815, 0.0
        %v874 = vmax.f32 %v820, 0.0
        %v875 = vmax.f32 %v823, 0.0
        %v876 = vmax.f32 %v828, 0.0
        %v877 = vmax.f32 %v831, 0.0
        %v878 = vmax.f32 %v836, 0.0
        %v879 = vmax.f32 %v839, 0.0
        %v880 = vmax.f32 %v844, 0.0
        %v881 = vmax.f32 %v847, 0.0
        %v882 = vpack.c.bf16 %v851, %v850
        %v883 = vpack.c.bf16 %v853, %v852
        %v884 = vpack.c.bf16 %v855, %v854
        %v885 = vpack.c.bf16 %v857, %v856
        %v886 = vpack.c.bf16 %v859, %v858
        %v887 = vpack.c.bf16 %v861, %v860
        %v888 = vpack.c.bf16 %v863, %v862
        %v889 = vpack.c.bf16 %v865, %v864
        %v890 = vpack.c.bf16 %v867, %v866
        %v891 = vpack.c.bf16 %v869, %v868
        %v892 = vpack.c.bf16 %v871, %v870
        %v893 = vpack.c.bf16 %v873, %v872
        %v894 = vpack.c.bf16 %v875, %v874
        %v895 = vpack.c.bf16 %v877, %v876
        %v896 = vpack.c.bf16 %v879, %v878
        %v897 = vpack.c.bf16 %v881, %v880
        %v898 = vld [vmem:[%s3] sm:$0xf]
        %v899 = vld [vmem:[%s3 + $0x4] sm:$0xf]
        %v900 = vld [vmem:[%s3 + $0x8] sm:$0xf]
        %v901 = vld [vmem:[%s3 + $0xc] sm:$0xf]
        %v902 = vld [vmem:[%s3 + $0x10] sm:$0xf]
        %v903 = vld [vmem:[%s3 + $0x14] sm:$0xf]
        %v904 = vld [vmem:[%s3 + $0x18] sm:$0xf]
        %v905 = vld [vmem:[%s3 + $0x1c] sm:$0xf]
        %v906 = vld [vmem:[%s4] sm:$0x1]
        %v908 = vlaneseq
        %v909 = vshrl.u32 %v908, 7
        %v910 = vsub.s32 0, %v909
        %v911 = vrot.slane %v906, %v910
        %v921 = vunpack.c.l.b16 %v898
        %v922 = vunpack.c.l.b16 %v899
        %v923 = vunpack.c.l.b16 %v900
        %v924 = vunpack.c.l.b16 %v901
        %v925 = vunpack.c.l.b16 %v902
        %v926 = vunpack.c.l.b16 %v903
        %v927 = vunpack.c.l.b16 %v904
        %v928 = vunpack.c.l.b16 %v905
        %v929 = vpack.c.b16 %v922, %v921
        %v930 = vpack.c.b16 %v924, %v923
        %v931 = vpack.c.b16 %v926, %v925
        %v932 = vpack.c.b16 %v928, %v927
        %vm937 = vcmask 523264
        %v939 = vsel %vm937, %v882, 0
        %v942 = vsel %vm937, %v883, 0
        %v945 = vsel %vm937, %v884, 0
        %v948 = vsel %vm937, %v885, 0
        %v951 = vsel %vm937, %v886, 0
        %v954 = vsel %vm937, %v887, 0
        %v957 = vsel %vm937, %v888, 0
        %v960 = vsel %vm937, %v889, 0
        %v963 = vsel %vm937, %v890, 0
        %v966 = vsel %vm937, %v891, 0
        %v969 = vsel %vm937, %v892, 0
        %v972 = vsel %vm937, %v893, 0
        %v975 = vsel %vm937, %v894, 0
        %v978 = vsel %vm937, %v895, 0
        %v981 = vsel %vm937, %v896, 0
        %v984 = vsel %vm937, %v897, 0
        %986 = vmatprep.subr.bf16.mxu0 0
        %987 = vmatpush1.bf16.msra.mxu0 %v929
        %988 = vmatprep.subr.bf16.mxu0 0
        %989 = vmatpush1.bf16.msra.mxu0 %v930
        %990 = vmatprep.subr.bf16.mxu0 0
        %991 = vmatpush1.bf16.msra.mxu0 %v931
        %992 = vmatprep.subr.bf16.mxu0 0
        %993 = vmatpush1.bf16.msra.mxu0 %v932
        %994 = vmatprep.subr.bf16.mxu0 0
        %995 = vmatpush1.bf16.msra.mxu0 0
        %996 = vmatprep.subr.bf16.mxu0 0
        %997 = vmatpush1.bf16.msra.mxu0 0
        %998 = vmatprep.subr.bf16.mxu0 0
        %999 = vmatpush1.bf16.msra.mxu0 0
        %1000 = vmatprep.subr.bf16.mxu0 0
        %1001 = vmatpush1.bf16.msra.mxu0 0
        %1002 = vmatprep.subr.bf16.mxu0 0
        %1003 = vmatpush1.bf16.msra.mxu0 0
        %1004 = vmatprep.subr.bf16.mxu0 0
        %1005 = vmatpush1.bf16.msra.mxu0 0
        %1006 = vmatprep.subr.bf16.mxu0 0
        %1007 = vmatpush1.bf16.msra.mxu0 0
        %1008 = vmatprep.subr.bf16.mxu0 0
        %1009 = vmatpush1.bf16.msra.mxu0 0
        %1010 = vmatprep.subr.bf16.mxu0 0
        %1011 = vmatpush1.bf16.msra.mxu0 0
        %1012 = vmatprep.subr.bf16.mxu0 0
        %1013 = vmatpush1.bf16.msra.mxu0 0
        %1014 = vmatprep.subr.bf16.mxu0 0
        %1015 = vmatpush1.bf16.msra.mxu0 0
        %1016 = vmatprep.subr.bf16.mxu0 0
        %1017 = vmatpush1.bf16.msra.mxu0 0
        %1018 = vmatprep.mubr.bf16.mxu0 0
        %1019 = vmatmul.mubr.bf16.gmra.mrb[0].mxu0 %v939
        %v1020 = vpop.f32.mrb[0].mxu0
        %v1021 = vadd.f32 %v911, %v1020
        %v1022 = vpop.f32.mrb[0].mxu0
        %v1023 = vpop.f32.mrb[0].mxu0
        %v1024 = vadd.f32 %v911, %v1023
        %v1025 = vpop.f32.mrb[0].mxu0
        %1026 = vmatprep.mubr.bf16.mxu0 0
        %1027 = vmatmul.mubr.bf16.gmra.mrb[0].mxu0 %v942
        %v1028 = vpop.f32.mrb[0].mxu0
        %v1029 = vadd.f32 %v911, %v1028
        %v1030 = vpop.f32.mrb[0].mxu0
        %v1031 = vpop.f32.mrb[0].mxu0
        %v1032 = vadd.f32 %v911, %v1031
        %v1033 = vpop.f32.mrb[0].mxu0
        %1034 = vmatprep.mubr.bf16.mxu0 0
        %1035 = vmatmul.mubr.bf16.gmra.mrb[0].mxu0 %v945
        %v1036 = vpop.f32.mrb[0].mxu0
        %v1037 = vadd.f32 %v911, %v1036
        %v1038 = vpop.f32.mrb[0].mxu0
        %v1039 = vpop.f32.mrb[0].mxu0
        %v1040 = vadd.f32 %v911, %v1039
        %v1041 = vpop.f32.mrb[0].mxu0
        %1042 = vmatprep.mubr.bf16.mxu0 0
        %1043 = vmatmul.mubr.bf16.gmra.mrb[0].mxu0 %v948
        %v1044 = vpop.f32.mrb[0].mxu0
        %v1045 = vadd.f32 %v911, %v1044
        %v1046 = vpop.f32.mrb[0].mxu0
        %v1047 = vpop.f32.mrb[0].mxu0
        %v1048 = vadd.f32 %v911, %v1047
        %v1049 = vpop.f32.mrb[0].mxu0
        %1050 = vmatprep.mubr.bf16.mxu0 0
        %1051 = vmatmul.mubr.bf16.gmra.mrb[0].mxu0 %v951
        %v1052 = vpop.f32.mrb[0].mxu0
        %v1053 = vadd.f32 %v911, %v1052
        %v1054 = vpop.f32.mrb[0].mxu0
        %v1055 = vpop.f32.mrb[0].mxu0
        %v1056 = vadd.f32 %v911, %v1055
        %v1057 = vpop.f32.mrb[0].mxu0
        %1058 = vmatprep.mubr.bf16.mxu0 0
        %1059 = vmatmul.mubr.bf16.gmra.mrb[0].mxu0 %v954
        %v1060 = vpop.f32.mrb[0].mxu0
        %v1061 = vadd.f32 %v911, %v1060
        %v1062 = vpop.f32.mrb[0].mxu0
        %v1063 = vpop.f32.mrb[0].mxu0
        %v1064 = vadd.f32 %v911, %v1063
        %v1065 = vpop.f32.mrb[0].mxu0
        %1066 = vmatprep.mubr.bf16.mxu0 0
        %1067 = vmatmul.mubr.bf16.gmra.mrb[0].mxu0 %v957
        %v1068 = vpop.f32.mrb[0].mxu0
        %v1069 = vadd.f32 %v911, %v1068
        %v1070 = vpop.f32.mrb[0].mxu0
        %v1071 = vpop.f32.mrb[0].mxu0
        %v1072 = vadd.f32 %v911, %v1071
        %v1073 = vpop.f32.mrb[0].mxu0
        %1074 = vmatprep.mubr.bf16.mxu0 0
        %1075 = vmatmul.mubr.bf16.gmra.mrb[0].mxu0 %v960
        %v1076 = vpop.f32.mrb[0].mxu0
        %v1077 = vadd.f32 %v911, %v1076
        %v1078 = vpop.f32.mrb[0].mxu0
        %v1079 = vpop.f32.mrb[0].mxu0
        %v1080 = vadd.f32 %v911, %v1079
        %v1081 = vpop.f32.mrb[0].mxu0
        %1082 = vmatprep.mubr.bf16.mxu0 0
        %1083 = vmatmul.mubr.bf16.gmra.mrb[0].mxu0 %v963
        %v1084 = vpop.f32.mrb[0].mxu0
        %v1085 = vadd.f32 %v911, %v1084
        %v1086 = vpop.f32.mrb[0].mxu0
        %v1087 = vpop.f32.mrb[0].mxu0
        %v1088 = vadd.f32 %v911, %v1087
        %v1089 = vpop.f32.mrb[0].mxu0
        %1090 = vmatprep.mubr.bf16.mxu0 0
        %1091 = vmatmul.mubr.bf16.gmra.mrb[0].mxu0 %v966
        %v1092 = vpop.f32.mrb[0].mxu0
        %v1093 = vadd.f32 %v911, %v1092
        %v1094 = vpop.f32.mrb[0].mxu0
        %v1095 = vpop.f32.mrb[0].mxu0
        %v1096 = vadd.f32 %v911, %v1095
        %v1097 = vpop.f32.mrb[0].mxu0
        %1098 = vmatprep.mubr.bf16.mxu0 0
        %1099 = vmatmul.mubr.bf16.gmra.mrb[0].mxu0 %v969
        %v1100 = vpop.f32.mrb[0].mxu0
        %v1101 = vadd.f32 %v911, %v1100
        %v1102 = vpop.f32.mrb[0].mxu0
        %v1103 = vpop.f32.mrb[0].mxu0
        %v1104 = vadd.f32 %v911, %v1103
        %v1105 = vpop.f32.mrb[0].mxu0
        %1106 = vmatprep.mubr.bf16.mxu0 0
        %1107 = vmatmul.mubr.bf16.gmra.mrb[0].mxu0 %v972
        %v1108 = vpop.f32.mrb[0].mxu0
        %v1109 = vadd.f32 %v911, %v1108
        %v1110 = vpop.f32.mrb[0].mxu0
        %v1111 = vpop.f32.mrb[0].mxu0
        %v1112 = vadd.f32 %v911, %v1111
        %v1113 = vpop.f32.mrb[0].mxu0
        %1114 = vmatprep.mubr.bf16.mxu0 0
        %1115 = vmatmul.mubr.bf16.gmra.mrb[0].mxu0 %v975
        %v1116 = vpop.f32.mrb[0].mxu0
        %v1117 = vadd.f32 %v911, %v1116
        %v1118 = vpop.f32.mrb[0].mxu0
        %v1119 = vpop.f32.mrb[0].mxu0
        %v1120 = vadd.f32 %v911, %v1119
        %v1121 = vpop.f32.mrb[0].mxu0
        %1122 = vmatprep.mubr.bf16.mxu0 0
        %1123 = vmatmul.mubr.bf16.gmra.mrb[0].mxu0 %v978
        %v1124 = vpop.f32.mrb[0].mxu0
        %v1125 = vadd.f32 %v911, %v1124
        %v1126 = vpop.f32.mrb[0].mxu0
        %v1127 = vpop.f32.mrb[0].mxu0
        %v1128 = vadd.f32 %v911, %v1127
        %v1129 = vpop.f32.mrb[0].mxu0
        %1130 = vmatprep.mubr.bf16.mxu0 0
        %1131 = vmatmul.mubr.bf16.gmra.mrb[0].mxu0 %v981
        %v1132 = vpop.f32.mrb[0].mxu0
        %v1133 = vadd.f32 %v911, %v1132
        %v1134 = vpop.f32.mrb[0].mxu0
        %v1135 = vpop.f32.mrb[0].mxu0
        %v1136 = vadd.f32 %v911, %v1135
        %v1137 = vpop.f32.mrb[0].mxu0
        %1138 = vmatprep.mubr.bf16.mxu0 0
        %1139 = vmatmul.mubr.bf16.gmra.mrb[0].mxu0 %v984
        %v1140 = vpop.f32.mrb[0].mxu0
        %v1141 = vadd.f32 %v911, %v1140
        %v1142 = vpop.f32.mrb[0].mxu0
        %v1143 = vpop.f32.mrb[0].mxu0
        %v1144 = vadd.f32 %v911, %v1143
        %v1145 = vpop.f32.mrb[0].mxu0
        %1146 = vdwg.mxu0
        %v1147 = vmax.f32 %v1021, 0.0
        %v1148 = vmax.f32 %v1024, 0.0
        %v1149 = vmax.f32 %v1029, 0.0
        %v1150 = vmax.f32 %v1032, 0.0
        %v1151 = vmax.f32 %v1037, 0.0
        %v1152 = vmax.f32 %v1040, 0.0
        %v1153 = vmax.f32 %v1045, 0.0
        %v1154 = vmax.f32 %v1048, 0.0
        %v1155 = vmax.f32 %v1053, 0.0
        %v1156 = vmax.f32 %v1056, 0.0
        %v1157 = vmax.f32 %v1061, 0.0
        %v1158 = vmax.f32 %v1064, 0.0
        %v1159 = vmax.f32 %v1069, 0.0
        %v1160 = vmax.f32 %v1072, 0.0
        %v1161 = vmax.f32 %v1077, 0.0
        %v1162 = vmax.f32 %v1080, 0.0
        %v1163 = vmax.f32 %v1085, 0.0
        %v1164 = vmax.f32 %v1088, 0.0
        %v1165 = vmax.f32 %v1093, 0.0
        %v1166 = vmax.f32 %v1096, 0.0
        %v1167 = vmax.f32 %v1101, 0.0
        %v1168 = vmax.f32 %v1104, 0.0
        %v1169 = vmax.f32 %v1109, 0.0
        %v1170 = vmax.f32 %v1112, 0.0
        %v1171 = vmax.f32 %v1117, 0.0
        %v1172 = vmax.f32 %v1120, 0.0
        %v1173 = vmax.f32 %v1125, 0.0
        %v1174 = vmax.f32 %v1128, 0.0
        %v1175 = vmax.f32 %v1133, 0.0
        %v1176 = vmax.f32 %v1136, 0.0
        %v1177 = vmax.f32 %v1141, 0.0
        %v1178 = vmax.f32 %v1144, 0.0
        %v1179 = vpack.c.bf16 %v1148, %v1147
        %v1180 = vpack.c.bf16 %v1150, %v1149
        %v1181 = vpack.c.bf16 %v1152, %v1151
        %v1182 = vpack.c.bf16 %v1154, %v1153
        %v1183 = vpack.c.bf16 %v1156, %v1155
        %v1184 = vpack.c.bf16 %v1158, %v1157
        %v1185 = vpack.c.bf16 %v1160, %v1159
        %v1186 = vpack.c.bf16 %v1162, %v1161
        %v1187 = vpack.c.bf16 %v1164, %v1163
        %v1188 = vpack.c.bf16 %v1166, %v1165
        %v1189 = vpack.c.bf16 %v1168, %v1167
        %v1190 = vpack.c.bf16 %v1170, %v1169
        %v1191 = vpack.c.bf16 %v1172, %v1171
        %v1192 = vpack.c.bf16 %v1174, %v1173
        %v1193 = vpack.c.bf16 %v1176, %v1175
        %v1194 = vpack.c.bf16 %v1178, %v1177
        %v1195 = vld [vmem:[%s5] sm:$0xf]
        %v1196 = vld [vmem:[%s5 + $0x4] sm:$0xf]
        %v1197 = vld [vmem:[%s5 + $0x8] sm:$0xf]
        %v1198 = vld [vmem:[%s5 + $0xc] sm:$0xf]
        %v1199 = vld [vmem:[%s6] sm:$0x1]
        %v1201 = vlaneseq
        %v1202 = vshrl.u32 %v1201, 7
        %v1203 = vsub.s32 0, %v1202
        %v1204 = vrot.slane %v1199, %v1203
        %v1210 = vunpack.c.l.b16 %v1195
        %v1211 = vunpack.c.l.b16 %v1196
        %v1212 = vunpack.c.l.b16 %v1197
        %v1213 = vunpack.c.l.b16 %v1198
        %v1214 = vpack.c.b16 %v1211, %v1210
        %v1215 = vpack.c.b16 %v1213, %v1212
        %vm1218 = vcmask 261120
        %v1220 = vsel %vm1218, %v1179, 0
        %v1223 = vsel %vm1218, %v1180, 0
        %v1226 = vsel %vm1218, %v1181, 0
        %v1229 = vsel %vm1218, %v1182, 0
        %v1232 = vsel %vm1218, %v1183, 0
        %v1235 = vsel %vm1218, %v1184, 0
        %v1238 = vsel %vm1218, %v1185, 0
        %v1241 = vsel %vm1218, %v1186, 0
        %v1244 = vsel %vm1218, %v1187, 0
        %v1247 = vsel %vm1218, %v1188, 0
        %v1250 = vsel %vm1218, %v1189, 0
        %v1253 = vsel %vm1218, %v1190, 0
        %v1256 = vsel %vm1218, %v1191, 0
        %v1259 = vsel %vm1218, %v1192, 0
        %v1262 = vsel %vm1218, %v1193, 0
        %v1265 = vsel %vm1218, %v1194, 0
        %1267 = vmatprep.subr.bf16.mxu0 0
        %1268 = vmatpush1.bf16.msra.mxu0 %v1214
        %1269 = vmatprep.subr.bf16.mxu0 0
        %1270 = vmatpush1.bf16.msra.mxu0 %v1215
        %1271 = vmatprep.subr.bf16.mxu0 0
        %1272 = vmatpush1.bf16.msra.mxu0 0
        %1273 = vmatprep.subr.bf16.mxu0 0
        %1274 = vmatpush1.bf16.msra.mxu0 0
        %1275 = vmatprep.subr.bf16.mxu0 0
        %1276 = vmatpush1.bf16.msra.mxu0 0
        %1277 = vmatprep.subr.bf16.mxu0 0
        %1278 = vmatpush1.bf16.msra.mxu0 0
        %1279 = vmatprep.subr.bf16.mxu0 0
        %1280 = vmatpush1.bf16.msra.mxu0 0
        %1281 = vmatprep.subr.bf16.mxu0 0
        %1282 = vmatpush1.bf16.msra.mxu0 0
        %1283 = vmatprep.subr.bf16.mxu0 0
        %1284 = vmatpush1.bf16.msra.mxu0 0
        %1285 = vmatprep.subr.bf16.mxu0 0
        %1286 = vmatpush1.bf16.msra.mxu0 0
        %1287 = vmatprep.subr.bf16.mxu0 0
        %1288 = vmatpush1.bf16.msra.mxu0 0
        %1289 = vmatprep.subr.bf16.mxu0 0
        %1290 = vmatpush1.bf16.msra.mxu0 0
        %1291 = vmatprep.subr.bf16.mxu0 0
        %1292 = vmatpush1.bf16.msra.mxu0 0
        %1293 = vmatprep.subr.bf16.mxu0 0
        %1294 = vmatpush1.bf16.msra.mxu0 0
        %1295 = vmatprep.subr.bf16.mxu0 0
        %1296 = vmatpush1.bf16.msra.mxu0 0
        %1297 = vmatprep.subr.bf16.mxu0 0
        %1298 = vmatpush1.bf16.msra.mxu0 0
        %1299 = vmatprep.mubr.bf16.mxu0 0
        %1300 = vmatmul.mubr.bf16.gmra.mrb[0].mxu0 %v1220
        %v1301 = vpop.f32.mrb[0].mxu0
        %v1302 = vadd.f32 %v1204, %v1301
        %v1303 = vpop.f32.mrb[0].mxu0
        %v1304 = vpop.f32.mrb[0].mxu0
        %v1305 = vadd.f32 %v1204, %v1304
        %v1306 = vpop.f32.mrb[0].mxu0
        %1307 = vmatprep.mubr.bf16.mxu0 0
        %1308 = vmatmul.mubr.bf16.gmra.mrb[0].mxu0 %v1223
        %v1309 = vpop.f32.mrb[0].mxu0
        %v1310 = vadd.f32 %v1204, %v1309
        %v1311 = vpop.f32.mrb[0].mxu0
        %v1312 = vpop.f32.mrb[0].mxu0
        %v1313 = vadd.f32 %v1204, %v1312
        %v1314 = vpop.f32.mrb[0].mxu0
        %1315 = vmatprep.mubr.bf16.mxu0 0
        %1316 = vmatmul.mubr.bf16.gmra.mrb[0].mxu0 %v1226
        %v1317 = vpop.f32.mrb[0].mxu0
        %v1318 = vadd.f32 %v1204, %v1317
        %v1319 = vpop.f32.mrb[0].mxu0
        %v1320 = vpop.f32.mrb[0].mxu0
        %v1321 = vadd.f32 %v1204, %v1320
        %v1322 = vpop.f32.mrb[0].mxu0
        %1323 = vmatprep.mubr.bf16.mxu0 0
        %1324 = vmatmul.mubr.bf16.gmra.mrb[0].mxu0 %v1229
        %v1325 = vpop.f32.mrb[0].mxu0
        %v1326 = vadd.f32 %v1204, %v1325
        %v1327 = vpop.f32.mrb[0].mxu0
        %v1328 = vpop.f32.mrb[0].mxu0
        %v1329 = vadd.f32 %v1204, %v1328
        %v1330 = vpop.f32.mrb[0].mxu0
        %1331 = vmatprep.mubr.bf16.mxu0 0
        %1332 = vmatmul.mubr.bf16.gmra.mrb[0].mxu0 %v1232
        %v1333 = vpop.f32.mrb[0].mxu0
        %v1334 = vadd.f32 %v1204, %v1333
        %v1335 = vpop.f32.mrb[0].mxu0
        %v1336 = vpop.f32.mrb[0].mxu0
        %v1337 = vadd.f32 %v1204, %v1336
        %v1338 = vpop.f32.mrb[0].mxu0
        %1339 = vmatprep.mubr.bf16.mxu0 0
        %1340 = vmatmul.mubr.bf16.gmra.mrb[0].mxu0 %v1235
        %v1341 = vpop.f32.mrb[0].mxu0
        %v1342 = vadd.f32 %v1204, %v1341
        %v1343 = vpop.f32.mrb[0].mxu0
        %v1344 = vpop.f32.mrb[0].mxu0
        %v1345 = vadd.f32 %v1204, %v1344
        %v1346 = vpop.f32.mrb[0].mxu0
        %1347 = vmatprep.mubr.bf16.mxu0 0
        %1348 = vmatmul.mubr.bf16.gmra.mrb[0].mxu0 %v1238
        %v1349 = vpop.f32.mrb[0].mxu0
        %v1350 = vadd.f32 %v1204, %v1349
        %v1351 = vpop.f32.mrb[0].mxu0
        %v1352 = vpop.f32.mrb[0].mxu0
        %v1353 = vadd.f32 %v1204, %v1352
        %v1354 = vpop.f32.mrb[0].mxu0
        %1355 = vmatprep.mubr.bf16.mxu0 0
        %1356 = vmatmul.mubr.bf16.gmra.mrb[0].mxu0 %v1241
        %v1357 = vpop.f32.mrb[0].mxu0
        %v1358 = vadd.f32 %v1204, %v1357
        %v1359 = vpop.f32.mrb[0].mxu0
        %v1360 = vpop.f32.mrb[0].mxu0
        %v1361 = vadd.f32 %v1204, %v1360
        %v1362 = vpop.f32.mrb[0].mxu0
        %1363 = vmatprep.mubr.bf16.mxu0 0
        %1364 = vmatmul.mubr.bf16.gmra.mrb[0].mxu0 %v1244
        %v1365 = vpop.f32.mrb[0].mxu0
        %v1366 = vadd.f32 %v1204, %v1365
        %v1367 = vpop.f32.mrb[0].mxu0
        %v1368 = vpop.f32.mrb[0].mxu0
        %v1369 = vadd.f32 %v1204, %v1368
        %v1370 = vpop.f32.mrb[0].mxu0
        %1371 = vmatprep.mubr.bf16.mxu0 0
        %1372 = vmatmul.mubr.bf16.gmra.mrb[0].mxu0 %v1247
        %v1373 = vpop.f32.mrb[0].mxu0
        %v1374 = vadd.f32 %v1204, %v1373
        %v1375 = vpop.f32.mrb[0].mxu0
        %v1376 = vpop.f32.mrb[0].mxu0
        %v1377 = vadd.f32 %v1204, %v1376
        %v1378 = vpop.f32.mrb[0].mxu0
        %1379 = vmatprep.mubr.bf16.mxu0 0
        %1380 = vmatmul.mubr.bf16.gmra.mrb[0].mxu0 %v1250
        %v1381 = vpop.f32.mrb[0].mxu0
        %v1382 = vadd.f32 %v1204, %v1381
        %v1383 = vpop.f32.mrb[0].mxu0
        %v1384 = vpop.f32.mrb[0].mxu0
        %v1385 = vadd.f32 %v1204, %v1384
        %v1386 = vpop.f32.mrb[0].mxu0
        %1387 = vmatprep.mubr.bf16.mxu0 0
        %1388 = vmatmul.mubr.bf16.gmra.mrb[0].mxu0 %v1253
        %v1389 = vpop.f32.mrb[0].mxu0
        %v1390 = vadd.f32 %v1204, %v1389
        %v1391 = vpop.f32.mrb[0].mxu0
        %v1392 = vpop.f32.mrb[0].mxu0
        %v1393 = vadd.f32 %v1204, %v1392
        %v1394 = vpop.f32.mrb[0].mxu0
        %1395 = vmatprep.mubr.bf16.mxu0 0
        %1396 = vmatmul.mubr.bf16.gmra.mrb[0].mxu0 %v1256
        %v1397 = vpop.f32.mrb[0].mxu0
        %v1398 = vadd.f32 %v1204, %v1397
        %v1399 = vpop.f32.mrb[0].mxu0
        %v1400 = vpop.f32.mrb[0].mxu0
        %v1401 = vadd.f32 %v1204, %v1400
        %v1402 = vpop.f32.mrb[0].mxu0
        %1403 = vmatprep.mubr.bf16.mxu0 0
        %1404 = vmatmul.mubr.bf16.gmra.mrb[0].mxu0 %v1259
        %v1405 = vpop.f32.mrb[0].mxu0
        %v1406 = vadd.f32 %v1204, %v1405
        %v1407 = vpop.f32.mrb[0].mxu0
        %v1408 = vpop.f32.mrb[0].mxu0
        %v1409 = vadd.f32 %v1204, %v1408
        %v1410 = vpop.f32.mrb[0].mxu0
        %1411 = vmatprep.mubr.bf16.mxu0 0
        %1412 = vmatmul.mubr.bf16.gmra.mrb[0].mxu0 %v1262
        %v1413 = vpop.f32.mrb[0].mxu0
        %v1414 = vadd.f32 %v1204, %v1413
        %v1415 = vpop.f32.mrb[0].mxu0
        %v1416 = vpop.f32.mrb[0].mxu0
        %v1417 = vadd.f32 %v1204, %v1416
        %v1418 = vpop.f32.mrb[0].mxu0
        %1419 = vmatprep.mubr.bf16.mxu0 0
        %1420 = vmatmul.mubr.bf16.gmra.mrb[0].mxu0 %v1265
        %v1421 = vpop.f32.mrb[0].mxu0
        %v1422 = vadd.f32 %v1204, %v1421
        %v1423 = vpop.f32.mrb[0].mxu0
        %v1424 = vpop.f32.mrb[0].mxu0
        %v1425 = vadd.f32 %v1204, %v1424
        %v1426 = vpop.f32.mrb[0].mxu0
        %1427 = vdwg.mxu0
        %v1428 = vmax.f32 %v1302, 0.0
        %v1429 = vmax.f32 %v1305, 0.0
        %v1430 = vmax.f32 %v1310, 0.0
        %v1431 = vmax.f32 %v1313, 0.0
        %v1432 = vmax.f32 %v1318, 0.0
        %v1433 = vmax.f32 %v1321, 0.0
        %v1434 = vmax.f32 %v1326, 0.0
        %v1435 = vmax.f32 %v1329, 0.0
        %v1436 = vmax.f32 %v1334, 0.0
        %v1437 = vmax.f32 %v1337, 0.0
        %v1438 = vmax.f32 %v1342, 0.0
        %v1439 = vmax.f32 %v1345, 0.0
        %v1440 = vmax.f32 %v1350, 0.0
        %v1441 = vmax.f32 %v1353, 0.0
        %v1442 = vmax.f32 %v1358, 0.0
        %v1443 = vmax.f32 %v1361, 0.0
        %v1444 = vmax.f32 %v1366, 0.0
        %v1445 = vmax.f32 %v1369, 0.0
        %v1446 = vmax.f32 %v1374, 0.0
        %v1447 = vmax.f32 %v1377, 0.0
        %v1448 = vmax.f32 %v1382, 0.0
        %v1449 = vmax.f32 %v1385, 0.0
        %v1450 = vmax.f32 %v1390, 0.0
        %v1451 = vmax.f32 %v1393, 0.0
        %v1452 = vmax.f32 %v1398, 0.0
        %v1453 = vmax.f32 %v1401, 0.0
        %v1454 = vmax.f32 %v1406, 0.0
        %v1455 = vmax.f32 %v1409, 0.0
        %v1456 = vmax.f32 %v1414, 0.0
        %v1457 = vmax.f32 %v1417, 0.0
        %v1458 = vmax.f32 %v1422, 0.0
        %v1459 = vmax.f32 %v1425, 0.0
        %v1460 = vpack.c.bf16 %v1429, %v1428
        %v1461 = vpack.c.bf16 %v1431, %v1430
        %v1462 = vpack.c.bf16 %v1433, %v1432
        %v1463 = vpack.c.bf16 %v1435, %v1434
        %v1464 = vpack.c.bf16 %v1437, %v1436
        %v1465 = vpack.c.bf16 %v1439, %v1438
        %v1466 = vpack.c.bf16 %v1441, %v1440
        %v1467 = vpack.c.bf16 %v1443, %v1442
        %v1468 = vpack.c.bf16 %v1445, %v1444
        %v1469 = vpack.c.bf16 %v1447, %v1446
        %v1470 = vpack.c.bf16 %v1449, %v1448
        %v1471 = vpack.c.bf16 %v1451, %v1450
        %v1472 = vpack.c.bf16 %v1453, %v1452
        %v1473 = vpack.c.bf16 %v1455, %v1454
        %v1474 = vpack.c.bf16 %v1457, %v1456
        %v1475 = vpack.c.bf16 %v1459, %v1458
        %v1476 = vld [vmem:[%s7] sm:$0xf]
        %v1477 = vld [vmem:[%s7 + $0x4] sm:$0xf]
        %v1478 = vld [vmem:[%s8] sm:$0x1]
        %v1480 = vlaneseq
        %v1481 = vshrl.u32 %v1480, 7
        %v1482 = vsub.s32 0, %v1481
        %v1483 = vrot.slane %v1478, %v1482
        %v1487 = vunpack.c.l.b16 %v1476
        %v1488 = vunpack.c.l.b16 %v1477
        %v1489 = vpack.c.b16 %v1488, %v1487
        %vm1491 = vcmask 130048
        %v1493 = vsel %vm1491, %v1460, 0
        %v1496 = vsel %vm1491, %v1461, 0
        %v1499 = vsel %vm1491, %v1462, 0
        %v1502 = vsel %vm1491, %v1463, 0
        %v1505 = vsel %vm1491, %v1464, 0
        %v1508 = vsel %vm1491, %v1465, 0
        %v1511 = vsel %vm1491, %v1466, 0
        %v1514 = vsel %vm1491, %v1467, 0
        %v1517 = vsel %vm1491, %v1468, 0
        %v1520 = vsel %vm1491, %v1469, 0
        %v1523 = vsel %vm1491, %v1470, 0
        %v1526 = vsel %vm1491, %v1471, 0
        %v1529 = vsel %vm1491, %v1472, 0
        %v1532 = vsel %vm1491, %v1473, 0
        %v1535 = vsel %vm1491, %v1474, 0
        %v1538 = vsel %vm1491, %v1475, 0
        %1540 = vmatprep.subr.bf16.mxu0 0
        %1541 = vmatpush1.bf16.msra.mxu0 %v1489
        %1542 = vmatprep.subr.bf16.mxu0 0
        %1543 = vmatpush1.bf16.msra.mxu0 0
        %1544 = vmatprep.subr.bf16.mxu0 0
        %1545 = vmatpush1.bf16.msra.mxu0 0
        %1546 = vmatprep.subr.bf16.mxu0 0
        %1547 = vmatpush1.bf16.msra.mxu0 0
        %1548 = vmatprep.subr.bf16.mxu0 0
        %1549 = vmatpush1.bf16.msra.mxu0 0
        %1550 = vmatprep.subr.bf16.mxu0 0
        %1551 = vmatpush1.bf16.msra.mxu0 0
        %1552 = vmatprep.subr.bf16.mxu0 0
        %1553 = vmatpush1.bf16.msra.mxu0 0
        %1554 = vmatprep.subr.bf16.mxu0 0
        %1555 = vmatpush1.bf16.msra.mxu0 0
        %1556 = vmatprep.subr.bf16.mxu0 0
        %1557 = vmatpush1.bf16.msra.mxu0 0
        %1558 = vmatprep.subr.bf16.mxu0 0
        %1559 = vmatpush1.bf16.msra.mxu0 0
        %1560 = vmatprep.subr.bf16.mxu0 0
        %1561 = vmatpush1.bf16.msra.mxu0 0
        %1562 = vmatprep.subr.bf16.mxu0 0
        %1563 = vmatpush1.bf16.msra.mxu0 0
        %1564 = vmatprep.subr.bf16.mxu0 0
        %1565 = vmatpush1.bf16.msra.mxu0 0
        %1566 = vmatprep.subr.bf16.mxu0 0
        %1567 = vmatpush1.bf16.msra.mxu0 0
        %1568 = vmatprep.subr.bf16.mxu0 0
        %1569 = vmatpush1.bf16.msra.mxu0 0
        %1570 = vmatprep.subr.bf16.mxu0 0
        %1571 = vmatpush1.bf16.msra.mxu0 0
        %1572 = vmatprep.mubr.bf16.mxu0 0
        %1573 = vmatmul.mubr.bf16.gmra.mrb[0].mxu0 %v1493
        %v1574 = vpop.f32.mrb[0].mxu0
        %v1575 = vadd.f32 %v1483, %v1574
        %v1576 = vpop.f32.mrb[0].mxu0
        %v1577 = vpop.f32.mrb[0].mxu0
        %v1578 = vadd.f32 %v1483, %v1577
        %v1579 = vpop.f32.mrb[0].mxu0
        %1580 = vmatprep.mubr.bf16.mxu0 0
        %1581 = vmatmul.mubr.bf16.gmra.mrb[0].mxu0 %v1496
        %v1582 = vpop.f32.mrb[0].mxu0
        %v1583 = vadd.f32 %v1483, %v1582
        %v1584 = vpop.f32.mrb[0].mxu0
        %v1585 = vpop.f32.mrb[0].mxu0
        %v1586 = vadd.f32 %v1483, %v1585
        %v1587 = vpop.f32.mrb[0].mxu0
        %1588 = vmatprep.mubr.bf16.mxu0 0
        %1589 = vmatmul.mubr.bf16.gmra.mrb[0].mxu0 %v1499
        %v1590 = vpop.f32.mrb[0].mxu0
        %v1591 = vadd.f32 %v1483, %v1590
        %v1592 = vpop.f32.mrb[0].mxu0
        %v1593 = vpop.f32.mrb[0].mxu0
        %v1594 = vadd.f32 %v1483, %v1593
        %v1595 = vpop.f32.mrb[0].mxu0
        %1596 = vmatprep.mubr.bf16.mxu0 0
        %1597 = vmatmul.mubr.bf16.gmra.mrb[0].mxu0 %v1502
        %v1598 = vpop.f32.mrb[0].mxu0
        %v1599 = vadd.f32 %v1483, %v1598
        %v1600 = vpop.f32.mrb[0].mxu0
        %v1601 = vpop.f32.mrb[0].mxu0
        %v1602 = vadd.f32 %v1483, %v1601
        %v1603 = vpop.f32.mrb[0].mxu0
        %1604 = vmatprep.mubr.bf16.mxu0 0
        %1605 = vmatmul.mubr.bf16.gmra.mrb[0].mxu0 %v1505
        %v1606 = vpop.f32.mrb[0].mxu0
        %v1607 = vadd.f32 %v1483, %v1606
        %v1608 = vpop.f32.mrb[0].mxu0
        %v1609 = vpop.f32.mrb[0].mxu0
        %v1610 = vadd.f32 %v1483, %v1609
        %v1611 = vpop.f32.mrb[0].mxu0
        %1612 = vmatprep.mubr.bf16.mxu0 0
        %1613 = vmatmul.mubr.bf16.gmra.mrb[0].mxu0 %v1508
        %v1614 = vpop.f32.mrb[0].mxu0
        %v1615 = vadd.f32 %v1483, %v1614
        %v1616 = vpop.f32.mrb[0].mxu0
        %v1617 = vpop.f32.mrb[0].mxu0
        %v1618 = vadd.f32 %v1483, %v1617
        %v1619 = vpop.f32.mrb[0].mxu0
        %1620 = vmatprep.mubr.bf16.mxu0 0
        %1621 = vmatmul.mubr.bf16.gmra.mrb[0].mxu0 %v1511
        %v1622 = vpop.f32.mrb[0].mxu0
        %v1623 = vadd.f32 %v1483, %v1622
        %v1624 = vpop.f32.mrb[0].mxu0
        %v1625 = vpop.f32.mrb[0].mxu0
        %v1626 = vadd.f32 %v1483, %v1625
        %v1627 = vpop.f32.mrb[0].mxu0
        %1628 = vmatprep.mubr.bf16.mxu0 0
        %1629 = vmatmul.mubr.bf16.gmra.mrb[0].mxu0 %v1514
        %v1630 = vpop.f32.mrb[0].mxu0
        %v1631 = vadd.f32 %v1483, %v1630
        %v1632 = vpop.f32.mrb[0].mxu0
        %v1633 = vpop.f32.mrb[0].mxu0
        %v1634 = vadd.f32 %v1483, %v1633
        %v1635 = vpop.f32.mrb[0].mxu0
        %1636 = vmatprep.mubr.bf16.mxu0 0
        %1637 = vmatmul.mubr.bf16.gmra.mrb[0].mxu0 %v1517
        %v1638 = vpop.f32.mrb[0].mxu0
        %v1639 = vadd.f32 %v1483, %v1638
        %v1640 = vpop.f32.mrb[0].mxu0
        %v1641 = vpop.f32.mrb[0].mxu0
        %v1642 = vadd.f32 %v1483, %v1641
        %v1643 = vpop.f32.mrb[0].mxu0
        %1644 = vmatprep.mubr.bf16.mxu0 0
        %1645 = vmatmul.mubr.bf16.gmra.mrb[0].mxu0 %v1520
        %v1646 = vpop.f32.mrb[0].mxu0
        %v1647 = vadd.f32 %v1483, %v1646
        %v1648 = vpop.f32.mrb[0].mxu0
        %v1649 = vpop.f32.mrb[0].mxu0
        %v1650 = vadd.f32 %v1483, %v1649
        %v1651 = vpop.f32.mrb[0].mxu0
        %1652 = vmatprep.mubr.bf16.mxu0 0
        %1653 = vmatmul.mubr.bf16.gmra.mrb[0].mxu0 %v1523
        %v1654 = vpop.f32.mrb[0].mxu0
        %v1655 = vadd.f32 %v1483, %v1654
        %v1656 = vpop.f32.mrb[0].mxu0
        %v1657 = vpop.f32.mrb[0].mxu0
        %v1658 = vadd.f32 %v1483, %v1657
        %v1659 = vpop.f32.mrb[0].mxu0
        %1660 = vmatprep.mubr.bf16.mxu0 0
        %1661 = vmatmul.mubr.bf16.gmra.mrb[0].mxu0 %v1526
        %v1662 = vpop.f32.mrb[0].mxu0
        %v1663 = vadd.f32 %v1483, %v1662
        %v1664 = vpop.f32.mrb[0].mxu0
        %v1665 = vpop.f32.mrb[0].mxu0
        %v1666 = vadd.f32 %v1483, %v1665
        %v1667 = vpop.f32.mrb[0].mxu0
        %1668 = vmatprep.mubr.bf16.mxu0 0
        %1669 = vmatmul.mubr.bf16.gmra.mrb[0].mxu0 %v1529
        %v1670 = vpop.f32.mrb[0].mxu0
        %v1671 = vadd.f32 %v1483, %v1670
        %v1672 = vpop.f32.mrb[0].mxu0
        %v1673 = vpop.f32.mrb[0].mxu0
        %v1674 = vadd.f32 %v1483, %v1673
        %v1675 = vpop.f32.mrb[0].mxu0
        %1676 = vmatprep.mubr.bf16.mxu0 0
        %1677 = vmatmul.mubr.bf16.gmra.mrb[0].mxu0 %v1532
        %v1678 = vpop.f32.mrb[0].mxu0
        %v1679 = vadd.f32 %v1483, %v1678
        %v1680 = vpop.f32.mrb[0].mxu0
        %v1681 = vpop.f32.mrb[0].mxu0
        %v1682 = vadd.f32 %v1483, %v1681
        %v1683 = vpop.f32.mrb[0].mxu0
        %1684 = vmatprep.mubr.bf16.mxu0 0
        %1685 = vmatmul.mubr.bf16.gmra.mrb[0].mxu0 %v1535
        %v1686 = vpop.f32.mrb[0].mxu0
        %v1687 = vadd.f32 %v1483, %v1686
        %v1688 = vpop.f32.mrb[0].mxu0
        %v1689 = vpop.f32.mrb[0].mxu0
        %v1690 = vadd.f32 %v1483, %v1689
        %v1691 = vpop.f32.mrb[0].mxu0
        %1692 = vmatprep.mubr.bf16.mxu0 0
        %1693 = vmatmul.mubr.bf16.gmra.mrb[0].mxu0 %v1538
        %v1694 = vpop.f32.mrb[0].mxu0
        %v1695 = vadd.f32 %v1483, %v1694
        %v1696 = vpop.f32.mrb[0].mxu0
        %v1697 = vpop.f32.mrb[0].mxu0
        %v1698 = vadd.f32 %v1483, %v1697
        %v1699 = vpop.f32.mrb[0].mxu0
        %1700 = vdwg.mxu0
        %v1701 = vpack.c.bf16 %v1578, %v1575
        %v1702 = vpack.c.bf16 %v1586, %v1583
        %v1703 = vpack.c.bf16 %v1594, %v1591
        %v1704 = vpack.c.bf16 %v1602, %v1599
        %v1705 = vpack.c.bf16 %v1610, %v1607
        %v1706 = vpack.c.bf16 %v1618, %v1615
        %v1707 = vpack.c.bf16 %v1626, %v1623
        %v1708 = vpack.c.bf16 %v1634, %v1631
        %v1709 = vpack.c.bf16 %v1642, %v1639
        %v1710 = vpack.c.bf16 %v1650, %v1647
        %v1711 = vpack.c.bf16 %v1658, %v1655
        %v1712 = vpack.c.bf16 %v1666, %v1663
        %v1713 = vpack.c.bf16 %v1674, %v1671
        %v1714 = vpack.c.bf16 %v1682, %v1679
        %v1715 = vpack.c.bf16 %v1690, %v1687
        %v1716 = vpack.c.bf16 %v1698, %v1695
        %v1717 = vld [vmem:[%s9] sm:$0xf]
        %v1718 = vld [vmem:[%s10] sm:$0x1]
        %v1720 = vlaneseq
        %v1721 = vshrl.u32 %v1720, 7
        %v1722 = vsub.s32 0, %v1721
        %v1723 = vrot.slane %v1718, %v1722
        %vm1725 = vcmask 64512
        %v1727 = vsel %vm1725, %v1701, 0
        %v1730 = vsel %vm1725, %v1702, 0
        %v1733 = vsel %vm1725, %v1703, 0
        %v1736 = vsel %vm1725, %v1704, 0
        %v1739 = vsel %vm1725, %v1705, 0
        %v1742 = vsel %vm1725, %v1706, 0
        %v1745 = vsel %vm1725, %v1707, 0
        %v1748 = vsel %vm1725, %v1708, 0
        %v1751 = vsel %vm1725, %v1709, 0
        %v1754 = vsel %vm1725, %v1710, 0
        %v1757 = vsel %vm1725, %v1711, 0
        %v1760 = vsel %vm1725, %v1712, 0
        %v1763 = vsel %vm1725, %v1713, 0
        %v1766 = vsel %vm1725, %v1714, 0
        %v1769 = vsel %vm1725, %v1715, 0
        %v1772 = vsel %vm1725, %v1716, 0
        %vm1774 = vcmask 1043456
        %v1776 = vsel %vm1774, %v1717, 0
        %1778 = vmatprep.subr.bf16.mxu0 0
        %1779 = vmatpush1.bf16.msra.mxu0 %v1776
        %1780 = vmatprep.subr.bf16.mxu0 0
        %1781 = vmatpush1.bf16.msra.mxu0 0
        %1782 = vmatprep.subr.bf16.mxu0 0
        %1783 = vmatpush1.bf16.msra.mxu0 0
        %1784 = vmatprep.subr.bf16.mxu0 0
        %1785 = vmatpush1.bf16.msra.mxu0 0
        %1786 = vmatprep.subr.bf16.mxu0 0
        %1787 = vmatpush1.bf16.msra.mxu0 0
        %1788 = vmatprep.subr.bf16.mxu0 0
        %1789 = vmatpush1.bf16.msra.mxu0 0
        %1790 = vmatprep.subr.bf16.mxu0 0
        %1791 = vmatpush1.bf16.msra.mxu0 0
        %1792 = vmatprep.subr.bf16.mxu0 0
        %1793 = vmatpush1.bf16.msra.mxu0 0
        %1794 = vmatprep.subr.bf16.mxu0 0
        %1795 = vmatpush1.bf16.msra.mxu0 0
        %1796 = vmatprep.subr.bf16.mxu0 0
        %1797 = vmatpush1.bf16.msra.mxu0 0
        %1798 = vmatprep.subr.bf16.mxu0 0
        %1799 = vmatpush1.bf16.msra.mxu0 0
        %1800 = vmatprep.subr.bf16.mxu0 0
        %1801 = vmatpush1.bf16.msra.mxu0 0
        %1802 = vmatprep.subr.bf16.mxu0 0
        %1803 = vmatpush1.bf16.msra.mxu0 0
        %1804 = vmatprep.subr.bf16.mxu0 0
        %1805 = vmatpush1.bf16.msra.mxu0 0
        %1806 = vmatprep.subr.bf16.mxu0 0
        %1807 = vmatpush1.bf16.msra.mxu0 0
        %1808 = vmatprep.subr.bf16.mxu0 0
        %1809 = vmatpush1.bf16.msra.mxu0 0
        %1810 = vmatprep.mubr.bf16.mxu0 0
        %1811 = vmatmul.mubr.bf16.gmra.mrb[0].mxu0 %v1727
        %v1812 = vpop.f32.mrb[0].mxu0
        %v1813 = vadd.f32 %v1723, %v1812
        %v1814 = vpop.f32.mrb[0].mxu0
        %v1815 = vpop.f32.mrb[0].mxu0
        %v1816 = vadd.f32 %v1723, %v1815
        %v1817 = vpop.f32.mrb[0].mxu0
        %1818 = vmatprep.mubr.bf16.mxu0 0
        %1819 = vmatmul.mubr.bf16.gmra.mrb[0].mxu0 %v1730
        %v1820 = vpop.f32.mrb[0].mxu0
        %v1821 = vadd.f32 %v1723, %v1820
        %v1822 = vpop.f32.mrb[0].mxu0
        %v1823 = vpop.f32.mrb[0].mxu0
        %v1824 = vadd.f32 %v1723, %v1823
        %v1825 = vpop.f32.mrb[0].mxu0
        %1826 = vmatprep.mubr.bf16.mxu0 0
        %1827 = vmatmul.mubr.bf16.gmra.mrb[0].mxu0 %v1733
        %v1828 = vpop.f32.mrb[0].mxu0
        %v1829 = vadd.f32 %v1723, %v1828
        %v1830 = vpop.f32.mrb[0].mxu0
        %v1831 = vpop.f32.mrb[0].mxu0
        %v1832 = vadd.f32 %v1723, %v1831
        %v1833 = vpop.f32.mrb[0].mxu0
        %1834 = vmatprep.mubr.bf16.mxu0 0
        %1835 = vmatmul.mubr.bf16.gmra.mrb[0].mxu0 %v1736
        %v1836 = vpop.f32.mrb[0].mxu0
        %v1837 = vadd.f32 %v1723, %v1836
        %v1838 = vpop.f32.mrb[0].mxu0
        %v1839 = vpop.f32.mrb[0].mxu0
        %v1840 = vadd.f32 %v1723, %v1839
        %v1841 = vpop.f32.mrb[0].mxu0
        %1842 = vmatprep.mubr.bf16.mxu0 0
        %1843 = vmatmul.mubr.bf16.gmra.mrb[0].mxu0 %v1739
        %v1844 = vpop.f32.mrb[0].mxu0
        %v1845 = vadd.f32 %v1723, %v1844
        %v1846 = vpop.f32.mrb[0].mxu0
        %v1847 = vpop.f32.mrb[0].mxu0
        %v1848 = vadd.f32 %v1723, %v1847
        %v1849 = vpop.f32.mrb[0].mxu0
        %1850 = vmatprep.mubr.bf16.mxu0 0
        %1851 = vmatmul.mubr.bf16.gmra.mrb[0].mxu0 %v1742
        %v1852 = vpop.f32.mrb[0].mxu0
        %v1853 = vadd.f32 %v1723, %v1852
        %v1854 = vpop.f32.mrb[0].mxu0
        %v1855 = vpop.f32.mrb[0].mxu0
        %v1856 = vadd.f32 %v1723, %v1855
        %v1857 = vpop.f32.mrb[0].mxu0
        %1858 = vmatprep.mubr.bf16.mxu0 0
        %1859 = vmatmul.mubr.bf16.gmra.mrb[0].mxu0 %v1745
        %v1860 = vpop.f32.mrb[0].mxu0
        %v1861 = vadd.f32 %v1723, %v1860
        %v1862 = vpop.f32.mrb[0].mxu0
        %v1863 = vpop.f32.mrb[0].mxu0
        %v1864 = vadd.f32 %v1723, %v1863
        %v1865 = vpop.f32.mrb[0].mxu0
        %1866 = vmatprep.mubr.bf16.mxu0 0
        %1867 = vmatmul.mubr.bf16.gmra.mrb[0].mxu0 %v1748
        %v1868 = vpop.f32.mrb[0].mxu0
        %v1869 = vadd.f32 %v1723, %v1868
        %v1870 = vpop.f32.mrb[0].mxu0
        %v1871 = vpop.f32.mrb[0].mxu0
        %v1872 = vadd.f32 %v1723, %v1871
        %v1873 = vpop.f32.mrb[0].mxu0
        %1874 = vmatprep.mubr.bf16.mxu0 0
        %1875 = vmatmul.mubr.bf16.gmra.mrb[0].mxu0 %v1751
        %v1876 = vpop.f32.mrb[0].mxu0
        %v1877 = vadd.f32 %v1723, %v1876
        %v1878 = vpop.f32.mrb[0].mxu0
        %v1879 = vpop.f32.mrb[0].mxu0
        %v1880 = vadd.f32 %v1723, %v1879
        %v1881 = vpop.f32.mrb[0].mxu0
        %1882 = vmatprep.mubr.bf16.mxu0 0
        %1883 = vmatmul.mubr.bf16.gmra.mrb[0].mxu0 %v1754
        %v1884 = vpop.f32.mrb[0].mxu0
        %v1885 = vadd.f32 %v1723, %v1884
        %v1886 = vpop.f32.mrb[0].mxu0
        %v1887 = vpop.f32.mrb[0].mxu0
        %v1888 = vadd.f32 %v1723, %v1887
        %v1889 = vpop.f32.mrb[0].mxu0
        %1890 = vmatprep.mubr.bf16.mxu0 0
        %1891 = vmatmul.mubr.bf16.gmra.mrb[0].mxu0 %v1757
        %v1892 = vpop.f32.mrb[0].mxu0
        %v1893 = vadd.f32 %v1723, %v1892
        %v1894 = vpop.f32.mrb[0].mxu0
        %v1895 = vpop.f32.mrb[0].mxu0
        %v1896 = vadd.f32 %v1723, %v1895
        %v1897 = vpop.f32.mrb[0].mxu0
        %1898 = vmatprep.mubr.bf16.mxu0 0
        %1899 = vmatmul.mubr.bf16.gmra.mrb[0].mxu0 %v1760
        %v1900 = vpop.f32.mrb[0].mxu0
        %v1901 = vadd.f32 %v1723, %v1900
        %v1902 = vpop.f32.mrb[0].mxu0
        %v1903 = vpop.f32.mrb[0].mxu0
        %v1904 = vadd.f32 %v1723, %v1903
        %v1905 = vpop.f32.mrb[0].mxu0
        %1906 = vmatprep.mubr.bf16.mxu0 0
        %1907 = vmatmul.mubr.bf16.gmra.mrb[0].mxu0 %v1763
        %v1908 = vpop.f32.mrb[0].mxu0
        %v1909 = vadd.f32 %v1723, %v1908
        %v1910 = vpop.f32.mrb[0].mxu0
        %v1911 = vpop.f32.mrb[0].mxu0
        %v1912 = vadd.f32 %v1723, %v1911
        %v1913 = vpop.f32.mrb[0].mxu0
        %1914 = vmatprep.mubr.bf16.mxu0 0
        %1915 = vmatmul.mubr.bf16.gmra.mrb[0].mxu0 %v1766
        %v1916 = vpop.f32.mrb[0].mxu0
        %v1917 = vadd.f32 %v1723, %v1916
        %v1918 = vpop.f32.mrb[0].mxu0
        %v1919 = vpop.f32.mrb[0].mxu0
        %v1920 = vadd.f32 %v1723, %v1919
        %v1921 = vpop.f32.mrb[0].mxu0
        %1922 = vmatprep.mubr.bf16.mxu0 0
        %1923 = vmatmul.mubr.bf16.gmra.mrb[0].mxu0 %v1769
        %v1924 = vpop.f32.mrb[0].mxu0
        %v1925 = vadd.f32 %v1723, %v1924
        %v1926 = vpop.f32.mrb[0].mxu0
        %v1927 = vpop.f32.mrb[0].mxu0
        %v1928 = vadd.f32 %v1723, %v1927
        %v1929 = vpop.f32.mrb[0].mxu0
        %1930 = vmatprep.mubr.bf16.mxu0 0
        %1931 = vmatmul.mubr.bf16.gmra.mrb[0].mxu0 %v1772
        %v1932 = vpop.f32.mrb[0].mxu0
        %v1933 = vadd.f32 %v1723, %v1932
        %v1934 = vpop.f32.mrb[0].mxu0
        %v1935 = vpop.f32.mrb[0].mxu0
        %v1936 = vadd.f32 %v1723, %v1935
        %v1937 = vpop.f32.mrb[0].mxu0
        %1938 = vdwg.mxu0
        %v1939 = vmax.f32 %v1813, 0.0
        %v1940 = vmax.f32 %v1816, 0.0
        %v1941 = vmax.f32 %v1821, 0.0
        %v1942 = vmax.f32 %v1824, 0.0
        %v1943 = vmax.f32 %v1829, 0.0
        %v1944 = vmax.f32 %v1832, 0.0
        %v1945 = vmax.f32 %v1837, 0.0
        %v1946 = vmax.f32 %v1840, 0.0
        %v1947 = vmax.f32 %v1845, 0.0
        %v1948 = vmax.f32 %v1848, 0.0
        %v1949 = vmax.f32 %v1853, 0.0
        %v1950 = vmax.f32 %v1856, 0.0
        %v1951 = vmax.f32 %v1861, 0.0
        %v1952 = vmax.f32 %v1864, 0.0
        %v1953 = vmax.f32 %v1869, 0.0
        %v1954 = vmax.f32 %v1872, 0.0
        %v1955 = vmax.f32 %v1877, 0.0
        %v1956 = vmax.f32 %v1880, 0.0
        %v1957 = vmax.f32 %v1885, 0.0
        %v1958 = vmax.f32 %v1888, 0.0
        %v1959 = vmax.f32 %v1893, 0.0
        %v1960 = vmax.f32 %v1896, 0.0
        %v1961 = vmax.f32 %v1901, 0.0
        %v1962 = vmax.f32 %v1904, 0.0
        %v1963 = vmax.f32 %v1909, 0.0
        %v1964 = vmax.f32 %v1912, 0.0
        %v1965 = vmax.f32 %v1917, 0.0
        %v1966 = vmax.f32 %v1920, 0.0
        %v1967 = vmax.f32 %v1925, 0.0
        %v1968 = vmax.f32 %v1928, 0.0
        %v1969 = vmax.f32 %v1933, 0.0
        %v1970 = vmax.f32 %v1936, 0.0
        %v1971 = vpack.c.bf16 %v1940, %v1939
        %v1972 = vpack.c.bf16 %v1942, %v1941
        %v1973 = vpack.c.bf16 %v1944, %v1943
        %v1974 = vpack.c.bf16 %v1946, %v1945
        %v1975 = vpack.c.bf16 %v1948, %v1947
        %v1976 = vpack.c.bf16 %v1950, %v1949
        %v1977 = vpack.c.bf16 %v1952, %v1951
        %v1978 = vpack.c.bf16 %v1954, %v1953
        %v1979 = vpack.c.bf16 %v1956, %v1955
        %v1980 = vpack.c.bf16 %v1958, %v1957
        %v1981 = vpack.c.bf16 %v1960, %v1959
        %v1982 = vpack.c.bf16 %v1962, %v1961
        %v1983 = vpack.c.bf16 %v1964, %v1963
        %v1984 = vpack.c.bf16 %v1966, %v1965
        %v1985 = vpack.c.bf16 %v1968, %v1967
        %v1986 = vpack.c.bf16 %v1970, %v1969
        %v1987 = vld [vmem:[%s11] sm:$0xf]
        %v1988 = vld [vmem:[%s11 + $0x4] sm:$0xf]
        %v1989 = vld [vmem:[%s12] sm:$0x1]
        %v1991 = vlaneseq
        %v1992 = vshrl.u32 %v1991, 7
        %v1993 = vsub.s32 0, %v1992
        %v1994 = vrot.slane %v1989, %v1993
        %v1998 = vunpack.c.l.b16 %v1987
        %v1999 = vunpack.c.l.b16 %v1988
        %v2000 = vpack.c.b16 %v1999, %v1998
        %v2003 = vsel %vm1491, %v1971, 0
        %v2006 = vsel %vm1491, %v1972, 0
        %v2009 = vsel %vm1491, %v1973, 0
        %v2012 = vsel %vm1491, %v1974, 0
        %v2015 = vsel %vm1491, %v1975, 0
        %v2018 = vsel %vm1491, %v1976, 0
        %v2021 = vsel %vm1491, %v1977, 0
        %v2024 = vsel %vm1491, %v1978, 0
        %v2027 = vsel %vm1491, %v1979, 0
        %v2030 = vsel %vm1491, %v1980, 0
        %v2033 = vsel %vm1491, %v1981, 0
        %v2036 = vsel %vm1491, %v1982, 0
        %v2039 = vsel %vm1491, %v1983, 0
        %v2042 = vsel %vm1491, %v1984, 0
        %v2045 = vsel %vm1491, %v1985, 0
        %v2048 = vsel %vm1491, %v1986, 0
        %2050 = vmatprep.subr.bf16.mxu0 0
        %2051 = vmatpush1.bf16.msra.mxu0 %v2000
        %2052 = vmatprep.subr.bf16.mxu0 0
        %2053 = vmatpush1.bf16.msra.mxu0 0
        %2054 = vmatprep.subr.bf16.mxu0 0
        %2055 = vmatpush1.bf16.msra.mxu0 0
        %2056 = vmatprep.subr.bf16.mxu0 0
        %2057 = vmatpush1.bf16.msra.mxu0 0
        %2058 = vmatprep.subr.bf16.mxu0 0
        %2059 = vmatpush1.bf16.msra.mxu0 0
        %2060 = vmatprep.subr.bf16.mxu0 0
        %2061 = vmatpush1.bf16.msra.mxu0 0
        %2062 = vmatprep.subr.bf16.mxu0 0
        %2063 = vmatpush1.bf16.msra.mxu0 0
        %2064 = vmatprep.subr.bf16.mxu0 0
        %2065 = vmatpush1.bf16.msra.mxu0 0
        %2066 = vmatprep.subr.bf16.mxu0 0
        %2067 = vmatpush1.bf16.msra.mxu0 0
        %2068 = vmatprep.subr.bf16.mxu0 0
        %2069 = vmatpush1.bf16.msra.mxu0 0
        %2070 = vmatprep.subr.bf16.mxu0 0
        %2071 = vmatpush1.bf16.msra.mxu0 0
        %2072 = vmatprep.subr.bf16.mxu0 0
        %2073 = vmatpush1.bf16.msra.mxu0 0
        %2074 = vmatprep.subr.bf16.mxu0 0
        %2075 = vmatpush1.bf16.msra.mxu0 0
        %2076 = vmatprep.subr.bf16.mxu0 0
        %2077 = vmatpush1.bf16.msra.mxu0 0
        %2078 = vmatprep.subr.bf16.mxu0 0
        %2079 = vmatpush1.bf16.msra.mxu0 0
        %2080 = vmatprep.subr.bf16.mxu0 0
        %2081 = vmatpush1.bf16.msra.mxu0 0
        %2082 = vmatprep.mubr.bf16.mxu0 0
        %2083 = vmatmul.mubr.bf16.gmra.mrb[0].mxu0 %v2003
        %v2084 = vpop.f32.mrb[0].mxu0
        %v2085 = vadd.f32 %v1994, %v2084
        %v2086 = vpop.f32.mrb[0].mxu0
        %v2087 = vpop.f32.mrb[0].mxu0
        %v2088 = vadd.f32 %v1994, %v2087
        %v2089 = vpop.f32.mrb[0].mxu0
        %2090 = vmatprep.mubr.bf16.mxu0 0
        %2091 = vmatmul.mubr.bf16.gmra.mrb[0].mxu0 %v2006
        %v2092 = vpop.f32.mrb[0].mxu0
        %v2093 = vadd.f32 %v1994, %v2092
        %v2094 = vpop.f32.mrb[0].mxu0
        %v2095 = vpop.f32.mrb[0].mxu0
        %v2096 = vadd.f32 %v1994, %v2095
        %v2097 = vpop.f32.mrb[0].mxu0
        %2098 = vmatprep.mubr.bf16.mxu0 0
        %2099 = vmatmul.mubr.bf16.gmra.mrb[0].mxu0 %v2009
        %v2100 = vpop.f32.mrb[0].mxu0
        %v2101 = vadd.f32 %v1994, %v2100
        %v2102 = vpop.f32.mrb[0].mxu0
        %v2103 = vpop.f32.mrb[0].mxu0
        %v2104 = vadd.f32 %v1994, %v2103
        %v2105 = vpop.f32.mrb[0].mxu0
        %2106 = vmatprep.mubr.bf16.mxu0 0
        %2107 = vmatmul.mubr.bf16.gmra.mrb[0].mxu0 %v2012
        %v2108 = vpop.f32.mrb[0].mxu0
        %v2109 = vadd.f32 %v1994, %v2108
        %v2110 = vpop.f32.mrb[0].mxu0
        %v2111 = vpop.f32.mrb[0].mxu0
        %v2112 = vadd.f32 %v1994, %v2111
        %v2113 = vpop.f32.mrb[0].mxu0
        %2114 = vmatprep.mubr.bf16.mxu0 0
        %2115 = vmatmul.mubr.bf16.gmra.mrb[0].mxu0 %v2015
        %v2116 = vpop.f32.mrb[0].mxu0
        %v2117 = vadd.f32 %v1994, %v2116
        %v2118 = vpop.f32.mrb[0].mxu0
        %v2119 = vpop.f32.mrb[0].mxu0
        %v2120 = vadd.f32 %v1994, %v2119
        %v2121 = vpop.f32.mrb[0].mxu0
        %2122 = vmatprep.mubr.bf16.mxu0 0
        %2123 = vmatmul.mubr.bf16.gmra.mrb[0].mxu0 %v2018
        %v2124 = vpop.f32.mrb[0].mxu0
        %v2125 = vadd.f32 %v1994, %v2124
        %v2126 = vpop.f32.mrb[0].mxu0
        %v2127 = vpop.f32.mrb[0].mxu0
        %v2128 = vadd.f32 %v1994, %v2127
        %v2129 = vpop.f32.mrb[0].mxu0
        %2130 = vmatprep.mubr.bf16.mxu0 0
        %2131 = vmatmul.mubr.bf16.gmra.mrb[0].mxu0 %v2021
        %v2132 = vpop.f32.mrb[0].mxu0
        %v2133 = vadd.f32 %v1994, %v2132
        %v2134 = vpop.f32.mrb[0].mxu0
        %v2135 = vpop.f32.mrb[0].mxu0
        %v2136 = vadd.f32 %v1994, %v2135
        %v2137 = vpop.f32.mrb[0].mxu0
        %2138 = vmatprep.mubr.bf16.mxu0 0
        %2139 = vmatmul.mubr.bf16.gmra.mrb[0].mxu0 %v2024
        %v2140 = vpop.f32.mrb[0].mxu0
        %v2141 = vadd.f32 %v1994, %v2140
        %v2142 = vpop.f32.mrb[0].mxu0
        %v2143 = vpop.f32.mrb[0].mxu0
        %v2144 = vadd.f32 %v1994, %v2143
        %v2145 = vpop.f32.mrb[0].mxu0
        %2146 = vmatprep.mubr.bf16.mxu0 0
        %2147 = vmatmul.mubr.bf16.gmra.mrb[0].mxu0 %v2027
        %v2148 = vpop.f32.mrb[0].mxu0
        %v2149 = vadd.f32 %v1994, %v2148
        %v2150 = vpop.f32.mrb[0].mxu0
        %v2151 = vpop.f32.mrb[0].mxu0
        %v2152 = vadd.f32 %v1994, %v2151
        %v2153 = vpop.f32.mrb[0].mxu0
        %2154 = vmatprep.mubr.bf16.mxu0 0
        %2155 = vmatmul.mubr.bf16.gmra.mrb[0].mxu0 %v2030
        %v2156 = vpop.f32.mrb[0].mxu0
        %v2157 = vadd.f32 %v1994, %v2156
        %v2158 = vpop.f32.mrb[0].mxu0
        %v2159 = vpop.f32.mrb[0].mxu0
        %v2160 = vadd.f32 %v1994, %v2159
        %v2161 = vpop.f32.mrb[0].mxu0
        %2162 = vmatprep.mubr.bf16.mxu0 0
        %2163 = vmatmul.mubr.bf16.gmra.mrb[0].mxu0 %v2033
        %v2164 = vpop.f32.mrb[0].mxu0
        %v2165 = vadd.f32 %v1994, %v2164
        %v2166 = vpop.f32.mrb[0].mxu0
        %v2167 = vpop.f32.mrb[0].mxu0
        %v2168 = vadd.f32 %v1994, %v2167
        %v2169 = vpop.f32.mrb[0].mxu0
        %2170 = vmatprep.mubr.bf16.mxu0 0
        %2171 = vmatmul.mubr.bf16.gmra.mrb[0].mxu0 %v2036
        %v2172 = vpop.f32.mrb[0].mxu0
        %v2173 = vadd.f32 %v1994, %v2172
        %v2174 = vpop.f32.mrb[0].mxu0
        %v2175 = vpop.f32.mrb[0].mxu0
        %v2176 = vadd.f32 %v1994, %v2175
        %v2177 = vpop.f32.mrb[0].mxu0
        %2178 = vmatprep.mubr.bf16.mxu0 0
        %2179 = vmatmul.mubr.bf16.gmra.mrb[0].mxu0 %v2039
        %v2180 = vpop.f32.mrb[0].mxu0
        %v2181 = vadd.f32 %v1994, %v2180
        %v2182 = vpop.f32.mrb[0].mxu0
        %v2183 = vpop.f32.mrb[0].mxu0
        %v2184 = vadd.f32 %v1994, %v2183
        %v2185 = vpop.f32.mrb[0].mxu0
        %2186 = vmatprep.mubr.bf16.mxu0 0
        %2187 = vmatmul.mubr.bf16.gmra.mrb[0].mxu0 %v2042
        %v2188 = vpop.f32.mrb[0].mxu0
        %v2189 = vadd.f32 %v1994, %v2188
        %v2190 = vpop.f32.mrb[0].mxu0
        %v2191 = vpop.f32.mrb[0].mxu0
        %v2192 = vadd.f32 %v1994, %v2191
        %v2193 = vpop.f32.mrb[0].mxu0
        %2194 = vmatprep.mubr.bf16.mxu0 0
        %2195 = vmatmul.mubr.bf16.gmra.mrb[0].mxu0 %v2045
        %v2196 = vpop.f32.mrb[0].mxu0
        %v2197 = vadd.f32 %v1994, %v2196
        %v2198 = vpop.f32.mrb[0].mxu0
        %v2199 = vpop.f32.mrb[0].mxu0
        %v2200 = vadd.f32 %v1994, %v2199
        %v2201 = vpop.f32.mrb[0].mxu0
        %2202 = vmatprep.mubr.bf16.mxu0 0
        %2203 = vmatmul.mubr.bf16.gmra.mrb[0].mxu0 %v2048
        %v2204 = vpop.f32.mrb[0].mxu0
        %v2205 = vadd.f32 %v1994, %v2204
        %v2206 = vpop.f32.mrb[0].mxu0
        %v2207 = vpop.f32.mrb[0].mxu0
        %v2208 = vadd.f32 %v1994, %v2207
        %v2209 = vpop.f32.mrb[0].mxu0
        %2210 = vdwg.mxu0
        %v2211 = vmax.f32 %v2085, 0.0
        %v2212 = vmax.f32 %v2088, 0.0
        %v2213 = vmax.f32 %v2093, 0.0
        %v2214 = vmax.f32 %v2096, 0.0
        %v2215 = vmax.f32 %v2101, 0.0
        %v2216 = vmax.f32 %v2104, 0.0
        %v2217 = vmax.f32 %v2109, 0.0
        %v2218 = vmax.f32 %v2112, 0.0
        %v2219 = vmax.f32 %v2117, 0.0
        %v2220 = vmax.f32 %v2120, 0.0
        %v2221 = vmax.f32 %v2125, 0.0
        %v2222 = vmax.f32 %v2128, 0.0
        %v2223 = vmax.f32 %v2133, 0.0
        %v2224 = vmax.f32 %v2136, 0.0
        %v2225 = vmax.f32 %v2141, 0.0
        %v2226 = vmax.f32 %v2144, 0.0
        %v2227 = vmax.f32 %v2149, 0.0
        %v2228 = vmax.f32 %v2152, 0.0
        %v2229 = vmax.f32 %v2157, 0.0
        %v2230 = vmax.f32 %v2160, 0.0
        %v2231 = vmax.f32 %v2165, 0.0
        %v2232 = vmax.f32 %v2168, 0.0
        %v2233 = vmax.f32 %v2173, 0.0
        %v2234 = vmax.f32 %v2176, 0.0
        %v2235 = vmax.f32 %v2181, 0.0
        %v2236 = vmax.f32 %v2184, 0.0
        %v2237 = vmax.f32 %v2189, 0.0
        %v2238 = vmax.f32 %v2192, 0.0
        %v2239 = vmax.f32 %v2197, 0.0
        %v2240 = vmax.f32 %v2200, 0.0
        %v2241 = vmax.f32 %v2205, 0.0
        %v2242 = vmax.f32 %v2208, 0.0
        %v2243 = vpack.c.bf16 %v2212, %v2211
        %v2244 = vpack.c.bf16 %v2214, %v2213
        %v2245 = vpack.c.bf16 %v2216, %v2215
        %v2246 = vpack.c.bf16 %v2218, %v2217
        %v2247 = vpack.c.bf16 %v2220, %v2219
        %v2248 = vpack.c.bf16 %v2222, %v2221
        %v2249 = vpack.c.bf16 %v2224, %v2223
        %v2250 = vpack.c.bf16 %v2226, %v2225
        %v2251 = vpack.c.bf16 %v2228, %v2227
        %v2252 = vpack.c.bf16 %v2230, %v2229
        %v2253 = vpack.c.bf16 %v2232, %v2231
        %v2254 = vpack.c.bf16 %v2234, %v2233
        %v2255 = vpack.c.bf16 %v2236, %v2235
        %v2256 = vpack.c.bf16 %v2238, %v2237
        %v2257 = vpack.c.bf16 %v2240, %v2239
        %v2258 = vpack.c.bf16 %v2242, %v2241
        %v2259 = vld [vmem:[%s13] sm:$0xf]
        %v2260 = vld [vmem:[%s13 + $0x4] sm:$0xf]
        %v2261 = vld [vmem:[%s13 + $0x8] sm:$0xf]
        %v2262 = vld [vmem:[%s13 + $0xc] sm:$0xf]
        %v2263 = vld [vmem:[%s14] sm:$0x1]
        %v2265 = vlaneseq
        %v2266 = vshrl.u32 %v2265, 7
        %v2267 = vsub.s32 0, %v2266
        %v2268 = vrot.slane %v2263, %v2267
        %v2274 = vunpack.c.l.b16 %v2259
        %v2275 = vunpack.c.l.b16 %v2260
        %v2276 = vunpack.c.l.b16 %v2261
        %v2277 = vunpack.c.l.b16 %v2262
        %v2278 = vpack.c.b16 %v2275, %v2274
        %v2279 = vpack.c.b16 %v2277, %v2276
        %v2283 = vsel %vm1218, %v2243, 0
        %v2286 = vsel %vm1218, %v2244, 0
        %v2289 = vsel %vm1218, %v2245, 0
        %v2292 = vsel %vm1218, %v2246, 0
        %v2295 = vsel %vm1218, %v2247, 0
        %v2298 = vsel %vm1218, %v2248, 0
        %v2301 = vsel %vm1218, %v2249, 0
        %v2304 = vsel %vm1218, %v2250, 0
        %v2307 = vsel %vm1218, %v2251, 0
        %v2310 = vsel %vm1218, %v2252, 0
        %v2313 = vsel %vm1218, %v2253, 0
        %v2316 = vsel %vm1218, %v2254, 0
        %v2319 = vsel %vm1218, %v2255, 0
        %v2322 = vsel %vm1218, %v2256, 0
        %v2325 = vsel %vm1218, %v2257, 0
        %v2328 = vsel %vm1218, %v2258, 0
        %2330 = vmatprep.subr.bf16.mxu0 0
        %2331 = vmatpush1.bf16.msra.mxu0 %v2278
        %2332 = vmatprep.subr.bf16.mxu0 0
        %2333 = vmatpush1.bf16.msra.mxu0 %v2279
        %2334 = vmatprep.subr.bf16.mxu0 0
        %2335 = vmatpush1.bf16.msra.mxu0 0
        %2336 = vmatprep.subr.bf16.mxu0 0
        %2337 = vmatpush1.bf16.msra.mxu0 0
        %2338 = vmatprep.subr.bf16.mxu0 0
        %2339 = vmatpush1.bf16.msra.mxu0 0
        %2340 = vmatprep.subr.bf16.mxu0 0
        %2341 = vmatpush1.bf16.msra.mxu0 0
        %2342 = vmatprep.subr.bf16.mxu0 0
        %2343 = vmatpush1.bf16.msra.mxu0 0
        %2344 = vmatprep.subr.bf16.mxu0 0
        %2345 = vmatpush1.bf16.msra.mxu0 0
        %2346 = vmatprep.subr.bf16.mxu0 0
        %2347 = vmatpush1.bf16.msra.mxu0 0
        %2348 = vmatprep.subr.bf16.mxu0 0
        %2349 = vmatpush1.bf16.msra.mxu0 0
        %2350 = vmatprep.subr.bf16.mxu0 0
        %2351 = vmatpush1.bf16.msra.mxu0 0
        %2352 = vmatprep.subr.bf16.mxu0 0
        %2353 = vmatpush1.bf16.msra.mxu0 0
        %2354 = vmatprep.subr.bf16.mxu0 0
        %2355 = vmatpush1.bf16.msra.mxu0 0
        %2356 = vmatprep.subr.bf16.mxu0 0
        %2357 = vmatpush1.bf16.msra.mxu0 0
        %2358 = vmatprep.subr.bf16.mxu0 0
        %2359 = vmatpush1.bf16.msra.mxu0 0
        %2360 = vmatprep.subr.bf16.mxu0 0
        %2361 = vmatpush1.bf16.msra.mxu0 0
        %2362 = vmatprep.mubr.bf16.mxu0 0
        %2363 = vmatmul.mubr.bf16.gmra.mrb[0].mxu0 %v2283
        %v2364 = vpop.f32.mrb[0].mxu0
        %v2365 = vadd.f32 %v2268, %v2364
        %v2366 = vpop.f32.mrb[0].mxu0
        %v2367 = vpop.f32.mrb[0].mxu0
        %v2368 = vadd.f32 %v2268, %v2367
        %v2369 = vpop.f32.mrb[0].mxu0
        %2370 = vmatprep.mubr.bf16.mxu0 0
        %2371 = vmatmul.mubr.bf16.gmra.mrb[0].mxu0 %v2286
        %v2372 = vpop.f32.mrb[0].mxu0
        %v2373 = vadd.f32 %v2268, %v2372
        %v2374 = vpop.f32.mrb[0].mxu0
        %v2375 = vpop.f32.mrb[0].mxu0
        %v2376 = vadd.f32 %v2268, %v2375
        %v2377 = vpop.f32.mrb[0].mxu0
        %2378 = vmatprep.mubr.bf16.mxu0 0
        %2379 = vmatmul.mubr.bf16.gmra.mrb[0].mxu0 %v2289
        %v2380 = vpop.f32.mrb[0].mxu0
        %v2381 = vadd.f32 %v2268, %v2380
        %v2382 = vpop.f32.mrb[0].mxu0
        %v2383 = vpop.f32.mrb[0].mxu0
        %v2384 = vadd.f32 %v2268, %v2383
        %v2385 = vpop.f32.mrb[0].mxu0
        %2386 = vmatprep.mubr.bf16.mxu0 0
        %2387 = vmatmul.mubr.bf16.gmra.mrb[0].mxu0 %v2292
        %v2388 = vpop.f32.mrb[0].mxu0
        %v2389 = vadd.f32 %v2268, %v2388
        %v2390 = vpop.f32.mrb[0].mxu0
        %v2391 = vpop.f32.mrb[0].mxu0
        %v2392 = vadd.f32 %v2268, %v2391
        %v2393 = vpop.f32.mrb[0].mxu0
        %2394 = vmatprep.mubr.bf16.mxu0 0
        %2395 = vmatmul.mubr.bf16.gmra.mrb[0].mxu0 %v2295
        %v2396 = vpop.f32.mrb[0].mxu0
        %v2397 = vadd.f32 %v2268, %v2396
        %v2398 = vpop.f32.mrb[0].mxu0
        %v2399 = vpop.f32.mrb[0].mxu0
        %v2400 = vadd.f32 %v2268, %v2399
        %v2401 = vpop.f32.mrb[0].mxu0
        %2402 = vmatprep.mubr.bf16.mxu0 0
        %2403 = vmatmul.mubr.bf16.gmra.mrb[0].mxu0 %v2298
        %v2404 = vpop.f32.mrb[0].mxu0
        %v2405 = vadd.f32 %v2268, %v2404
        %v2406 = vpop.f32.mrb[0].mxu0
        %v2407 = vpop.f32.mrb[0].mxu0
        %v2408 = vadd.f32 %v2268, %v2407
        %v2409 = vpop.f32.mrb[0].mxu0
        %2410 = vmatprep.mubr.bf16.mxu0 0
        %2411 = vmatmul.mubr.bf16.gmra.mrb[0].mxu0 %v2301
        %v2412 = vpop.f32.mrb[0].mxu0
        %v2413 = vadd.f32 %v2268, %v2412
        %v2414 = vpop.f32.mrb[0].mxu0
        %v2415 = vpop.f32.mrb[0].mxu0
        %v2416 = vadd.f32 %v2268, %v2415
        %v2417 = vpop.f32.mrb[0].mxu0
        %2418 = vmatprep.mubr.bf16.mxu0 0
        %2419 = vmatmul.mubr.bf16.gmra.mrb[0].mxu0 %v2304
        %v2420 = vpop.f32.mrb[0].mxu0
        %v2421 = vadd.f32 %v2268, %v2420
        %v2422 = vpop.f32.mrb[0].mxu0
        %v2423 = vpop.f32.mrb[0].mxu0
        %v2424 = vadd.f32 %v2268, %v2423
        %v2425 = vpop.f32.mrb[0].mxu0
        %2426 = vmatprep.mubr.bf16.mxu0 0
        %2427 = vmatmul.mubr.bf16.gmra.mrb[0].mxu0 %v2307
        %v2428 = vpop.f32.mrb[0].mxu0
        %v2429 = vadd.f32 %v2268, %v2428
        %v2430 = vpop.f32.mrb[0].mxu0
        %v2431 = vpop.f32.mrb[0].mxu0
        %v2432 = vadd.f32 %v2268, %v2431
        %v2433 = vpop.f32.mrb[0].mxu0
        %2434 = vmatprep.mubr.bf16.mxu0 0
        %2435 = vmatmul.mubr.bf16.gmra.mrb[0].mxu0 %v2310
        %v2436 = vpop.f32.mrb[0].mxu0
        %v2437 = vadd.f32 %v2268, %v2436
        %v2438 = vpop.f32.mrb[0].mxu0
        %v2439 = vpop.f32.mrb[0].mxu0
        %v2440 = vadd.f32 %v2268, %v2439
        %v2441 = vpop.f32.mrb[0].mxu0
        %2442 = vmatprep.mubr.bf16.mxu0 0
        %2443 = vmatmul.mubr.bf16.gmra.mrb[0].mxu0 %v2313
        %v2444 = vpop.f32.mrb[0].mxu0
        %v2445 = vadd.f32 %v2268, %v2444
        %v2446 = vpop.f32.mrb[0].mxu0
        %v2447 = vpop.f32.mrb[0].mxu0
        %v2448 = vadd.f32 %v2268, %v2447
        %v2449 = vpop.f32.mrb[0].mxu0
        %2450 = vmatprep.mubr.bf16.mxu0 0
        %2451 = vmatmul.mubr.bf16.gmra.mrb[0].mxu0 %v2316
        %v2452 = vpop.f32.mrb[0].mxu0
        %v2453 = vadd.f32 %v2268, %v2452
        %v2454 = vpop.f32.mrb[0].mxu0
        %v2455 = vpop.f32.mrb[0].mxu0
        %v2456 = vadd.f32 %v2268, %v2455
        %v2457 = vpop.f32.mrb[0].mxu0
        %2458 = vmatprep.mubr.bf16.mxu0 0
        %2459 = vmatmul.mubr.bf16.gmra.mrb[0].mxu0 %v2319
        %v2460 = vpop.f32.mrb[0].mxu0
        %v2461 = vadd.f32 %v2268, %v2460
        %v2462 = vpop.f32.mrb[0].mxu0
        %v2463 = vpop.f32.mrb[0].mxu0
        %v2464 = vadd.f32 %v2268, %v2463
        %v2465 = vpop.f32.mrb[0].mxu0
        %2466 = vmatprep.mubr.bf16.mxu0 0
        %2467 = vmatmul.mubr.bf16.gmra.mrb[0].mxu0 %v2322
        %v2468 = vpop.f32.mrb[0].mxu0
        %v2469 = vadd.f32 %v2268, %v2468
        %v2470 = vpop.f32.mrb[0].mxu0
        %v2471 = vpop.f32.mrb[0].mxu0
        %v2472 = vadd.f32 %v2268, %v2471
        %v2473 = vpop.f32.mrb[0].mxu0
        %2474 = vmatprep.mubr.bf16.mxu0 0
        %2475 = vmatmul.mubr.bf16.gmra.mrb[0].mxu0 %v2325
        %v2476 = vpop.f32.mrb[0].mxu0
        %v2477 = vadd.f32 %v2268, %v2476
        %v2478 = vpop.f32.mrb[0].mxu0
        %v2479 = vpop.f32.mrb[0].mxu0
        %v2480 = vadd.f32 %v2268, %v2479
        %v2481 = vpop.f32.mrb[0].mxu0
        %2482 = vmatprep.mubr.bf16.mxu0 0
        %2483 = vmatmul.mubr.bf16.gmra.mrb[0].mxu0 %v2328
        %v2484 = vpop.f32.mrb[0].mxu0
        %v2485 = vadd.f32 %v2268, %v2484
        %v2486 = vpop.f32.mrb[0].mxu0
        %v2487 = vpop.f32.mrb[0].mxu0
        %v2488 = vadd.f32 %v2268, %v2487
        %v2489 = vpop.f32.mrb[0].mxu0
        %2490 = vdwg.mxu0
        %v2491 = vmax.f32 %v2365, 0.0
        %v2492 = vmax.f32 %v2368, 0.0
        %v2493 = vmax.f32 %v2373, 0.0
        %v2494 = vmax.f32 %v2376, 0.0
        %v2495 = vmax.f32 %v2381, 0.0
        %v2496 = vmax.f32 %v2384, 0.0
        %v2497 = vmax.f32 %v2389, 0.0
        %v2498 = vmax.f32 %v2392, 0.0
        %v2499 = vmax.f32 %v2397, 0.0
        %v2500 = vmax.f32 %v2400, 0.0
        %v2501 = vmax.f32 %v2405, 0.0
        %v2502 = vmax.f32 %v2408, 0.0
        %v2503 = vmax.f32 %v2413, 0.0
        %v2504 = vmax.f32 %v2416, 0.0
        %v2505 = vmax.f32 %v2421, 0.0
        %v2506 = vmax.f32 %v2424, 0.0
        %v2507 = vmax.f32 %v2429, 0.0
        %v2508 = vmax.f32 %v2432, 0.0
        %v2509 = vmax.f32 %v2437, 0.0
        %v2510 = vmax.f32 %v2440, 0.0
        %v2511 = vmax.f32 %v2445, 0.0
        %v2512 = vmax.f32 %v2448, 0.0
        %v2513 = vmax.f32 %v2453, 0.0
        %v2514 = vmax.f32 %v2456, 0.0
        %v2515 = vmax.f32 %v2461, 0.0
        %v2516 = vmax.f32 %v2464, 0.0
        %v2517 = vmax.f32 %v2469, 0.0
        %v2518 = vmax.f32 %v2472, 0.0
        %v2519 = vmax.f32 %v2477, 0.0
        %v2520 = vmax.f32 %v2480, 0.0
        %v2521 = vmax.f32 %v2485, 0.0
        %v2522 = vmax.f32 %v2488, 0.0
        %v2523 = vpack.c.bf16 %v2492, %v2491
        %v2524 = vpack.c.bf16 %v2494, %v2493
        %v2525 = vpack.c.bf16 %v2496, %v2495
        %v2526 = vpack.c.bf16 %v2498, %v2497
        %v2527 = vpack.c.bf16 %v2500, %v2499
        %v2528 = vpack.c.bf16 %v2502, %v2501
        %v2529 = vpack.c.bf16 %v2504, %v2503
        %v2530 = vpack.c.bf16 %v2506, %v2505
        %v2531 = vpack.c.bf16 %v2508, %v2507
        %v2532 = vpack.c.bf16 %v2510, %v2509
        %v2533 = vpack.c.bf16 %v2512, %v2511
        %v2534 = vpack.c.bf16 %v2514, %v2513
        %v2535 = vpack.c.bf16 %v2516, %v2515
        %v2536 = vpack.c.bf16 %v2518, %v2517
        %v2537 = vpack.c.bf16 %v2520, %v2519
        %v2538 = vpack.c.bf16 %v2522, %v2521
        %v2539 = vld [vmem:[%s15] sm:$0xf]
        %v2540 = vld [vmem:[%s15 + $0x4] sm:$0xf]
        %v2541 = vld [vmem:[%s15 + $0x8] sm:$0xf]
        %v2542 = vld [vmem:[%s15 + $0xc] sm:$0xf]
        %v2543 = vld [vmem:[%s15 + $0x10] sm:$0xf]
        %v2544 = vld [vmem:[%s15 + $0x14] sm:$0xf]
        %v2545 = vld [vmem:[%s15 + $0x18] sm:$0xf]
        %v2546 = vld [vmem:[%s15 + $0x1c] sm:$0xf]
        %v2547 = vld [vmem:[%s16] sm:$0x1]
        %v2549 = vlaneseq
        %v2550 = vshrl.u32 %v2549, 7
        %v2551 = vsub.s32 0, %v2550
        %v2552 = vrot.slane %v2547, %v2551
        %v2562 = vunpack.c.l.b16 %v2539
        %v2563 = vunpack.c.l.b16 %v2540
        %v2564 = vunpack.c.l.b16 %v2541
        %v2565 = vunpack.c.l.b16 %v2542
        %v2566 = vunpack.c.l.b16 %v2543
        %v2567 = vunpack.c.l.b16 %v2544
        %v2568 = vunpack.c.l.b16 %v2545
        %v2569 = vunpack.c.l.b16 %v2546
        %v2570 = vpack.c.b16 %v2563, %v2562
        %v2571 = vpack.c.b16 %v2565, %v2564
        %v2572 = vpack.c.b16 %v2567, %v2566
        %v2573 = vpack.c.b16 %v2569, %v2568
        %v2579 = vsel %vm937, %v2523, 0
        %v2582 = vsel %vm937, %v2524, 0
        %v2585 = vsel %vm937, %v2525, 0
        %v2588 = vsel %vm937, %v2526, 0
        %v2591 = vsel %vm937, %v2527, 0
        %v2594 = vsel %vm937, %v2528, 0
        %v2597 = vsel %vm937, %v2529, 0
        %v2600 = vsel %vm937, %v2530, 0
        %v2603 = vsel %vm937, %v2531, 0
        %v2606 = vsel %vm937, %v2532, 0
        %v2609 = vsel %vm937, %v2533, 0
        %v2612 = vsel %vm937, %v2534, 0
        %v2615 = vsel %vm937, %v2535, 0
        %v2618 = vsel %vm937, %v2536, 0
        %v2621 = vsel %vm937, %v2537, 0
        %v2624 = vsel %vm937, %v2538, 0
        %2626 = vmatprep.subr.bf16.mxu0 0
        %2627 = vmatpush1.bf16.msra.mxu0 %v2570
        %2628 = vmatprep.subr.bf16.mxu0 0
        %2629 = vmatpush1.bf16.msra.mxu0 %v2571
        %2630 = vmatprep.subr.bf16.mxu0 0
        %2631 = vmatpush1.bf16.msra.mxu0 %v2572
        %2632 = vmatprep.subr.bf16.mxu0 0
        %2633 = vmatpush1.bf16.msra.mxu0 %v2573
        %2634 = vmatprep.subr.bf16.mxu0 0
        %2635 = vmatpush1.bf16.msra.mxu0 0
        %2636 = vmatprep.subr.bf16.mxu0 0
        %2637 = vmatpush1.bf16.msra.mxu0 0
        %2638 = vmatprep.subr.bf16.mxu0 0
        %2639 = vmatpush1.bf16.msra.mxu0 0
        %2640 = vmatprep.subr.bf16.mxu0 0
        %2641 = vmatpush1.bf16.msra.mxu0 0
        %2642 = vmatprep.subr.bf16.mxu0 0
        %2643 = vmatpush1.bf16.msra.mxu0 0
        %2644 = vmatprep.subr.bf16.mxu0 0
        %2645 = vmatpush1.bf16.msra.mxu0 0
        %2646 = vmatprep.subr.bf16.mxu0 0
        %2647 = vmatpush1.bf16.msra.mxu0 0
        %2648 = vmatprep.subr.bf16.mxu0 0
        %2649 = vmatpush1.bf16.msra.mxu0 0
        %2650 = vmatprep.subr.bf16.mxu0 0
        %2651 = vmatpush1.bf16.msra.mxu0 0
        %2652 = vmatprep.subr.bf16.mxu0 0
        %2653 = vmatpush1.bf16.msra.mxu0 0
        %2654 = vmatprep.subr.bf16.mxu0 0
        %2655 = vmatpush1.bf16.msra.mxu0 0
        %2656 = vmatprep.subr.bf16.mxu0 0
        %2657 = vmatpush1.bf16.msra.mxu0 0
        %2658 = vmatprep.mubr.bf16.mxu0 0
        %2659 = vmatmul.mubr.bf16.gmra.mrb[0].mxu0 %v2579
        %v2660 = vpop.f32.mrb[0].mxu0
        %v2661 = vadd.f32 %v2552, %v2660
        %v2662 = vpop.f32.mrb[0].mxu0
        %v2663 = vpop.f32.mrb[0].mxu0
        %v2664 = vadd.f32 %v2552, %v2663
        %v2665 = vpop.f32.mrb[0].mxu0
        %2666 = vmatprep.mubr.bf16.mxu0 0
        %2667 = vmatmul.mubr.bf16.gmra.mrb[0].mxu0 %v2582
        %v2668 = vpop.f32.mrb[0].mxu0
        %v2669 = vadd.f32 %v2552, %v2668
        %v2670 = vpop.f32.mrb[0].mxu0
        %v2671 = vpop.f32.mrb[0].mxu0
        %v2672 = vadd.f32 %v2552, %v2671
        %v2673 = vpop.f32.mrb[0].mxu0
        %2674 = vmatprep.mubr.bf16.mxu0 0
        %2675 = vmatmul.mubr.bf16.gmra.mrb[0].mxu0 %v2585
        %v2676 = vpop.f32.mrb[0].mxu0
        %v2677 = vadd.f32 %v2552, %v2676
        %v2678 = vpop.f32.mrb[0].mxu0
        %v2679 = vpop.f32.mrb[0].mxu0
        %v2680 = vadd.f32 %v2552, %v2679
        %v2681 = vpop.f32.mrb[0].mxu0
        %2682 = vmatprep.mubr.bf16.mxu0 0
        %2683 = vmatmul.mubr.bf16.gmra.mrb[0].mxu0 %v2588
        %v2684 = vpop.f32.mrb[0].mxu0
        %v2685 = vadd.f32 %v2552, %v2684
        %v2686 = vpop.f32.mrb[0].mxu0
        %v2687 = vpop.f32.mrb[0].mxu0
        %v2688 = vadd.f32 %v2552, %v2687
        %v2689 = vpop.f32.mrb[0].mxu0
        %2690 = vmatprep.mubr.bf16.mxu0 0
        %2691 = vmatmul.mubr.bf16.gmra.mrb[0].mxu0 %v2591
        %v2692 = vpop.f32.mrb[0].mxu0
        %v2693 = vadd.f32 %v2552, %v2692
        %v2694 = vpop.f32.mrb[0].mxu0
        %v2695 = vpop.f32.mrb[0].mxu0
        %v2696 = vadd.f32 %v2552, %v2695
        %v2697 = vpop.f32.mrb[0].mxu0
        %2698 = vmatprep.mubr.bf16.mxu0 0
        %2699 = vmatmul.mubr.bf16.gmra.mrb[0].mxu0 %v2594
        %v2700 = vpop.f32.mrb[0].mxu0
        %v2701 = vadd.f32 %v2552, %v2700
        %v2702 = vpop.f32.mrb[0].mxu0
        %v2703 = vpop.f32.mrb[0].mxu0
        %v2704 = vadd.f32 %v2552, %v2703
        %v2705 = vpop.f32.mrb[0].mxu0
        %2706 = vmatprep.mubr.bf16.mxu0 0
        %2707 = vmatmul.mubr.bf16.gmra.mrb[0].mxu0 %v2597
        %v2708 = vpop.f32.mrb[0].mxu0
        %v2709 = vadd.f32 %v2552, %v2708
        %v2710 = vpop.f32.mrb[0].mxu0
        %v2711 = vpop.f32.mrb[0].mxu0
        %v2712 = vadd.f32 %v2552, %v2711
        %v2713 = vpop.f32.mrb[0].mxu0
        %2714 = vmatprep.mubr.bf16.mxu0 0
        %2715 = vmatmul.mubr.bf16.gmra.mrb[0].mxu0 %v2600
        %v2716 = vpop.f32.mrb[0].mxu0
        %v2717 = vadd.f32 %v2552, %v2716
        %v2718 = vpop.f32.mrb[0].mxu0
        %v2719 = vpop.f32.mrb[0].mxu0
        %v2720 = vadd.f32 %v2552, %v2719
        %v2721 = vpop.f32.mrb[0].mxu0
        %2722 = vmatprep.mubr.bf16.mxu0 0
        %2723 = vmatmul.mubr.bf16.gmra.mrb[0].mxu0 %v2603
        %v2724 = vpop.f32.mrb[0].mxu0
        %v2725 = vadd.f32 %v2552, %v2724
        %v2726 = vpop.f32.mrb[0].mxu0
        %v2727 = vpop.f32.mrb[0].mxu0
        %v2728 = vadd.f32 %v2552, %v2727
        %v2729 = vpop.f32.mrb[0].mxu0
        %2730 = vmatprep.mubr.bf16.mxu0 0
        %2731 = vmatmul.mubr.bf16.gmra.mrb[0].mxu0 %v2606
        %v2732 = vpop.f32.mrb[0].mxu0
        %v2733 = vadd.f32 %v2552, %v2732
        %v2734 = vpop.f32.mrb[0].mxu0
        %v2735 = vpop.f32.mrb[0].mxu0
        %v2736 = vadd.f32 %v2552, %v2735
        %v2737 = vpop.f32.mrb[0].mxu0
        %2738 = vmatprep.mubr.bf16.mxu0 0
        %2739 = vmatmul.mubr.bf16.gmra.mrb[0].mxu0 %v2609
        %v2740 = vpop.f32.mrb[0].mxu0
        %v2741 = vadd.f32 %v2552, %v2740
        %v2742 = vpop.f32.mrb[0].mxu0
        %v2743 = vpop.f32.mrb[0].mxu0
        %v2744 = vadd.f32 %v2552, %v2743
        %v2745 = vpop.f32.mrb[0].mxu0
        %2746 = vmatprep.mubr.bf16.mxu0 0
        %2747 = vmatmul.mubr.bf16.gmra.mrb[0].mxu0 %v2612
        %v2748 = vpop.f32.mrb[0].mxu0
        %v2749 = vadd.f32 %v2552, %v2748
        %v2750 = vpop.f32.mrb[0].mxu0
        %v2751 = vpop.f32.mrb[0].mxu0
        %v2752 = vadd.f32 %v2552, %v2751
        %v2753 = vpop.f32.mrb[0].mxu0
        %2754 = vmatprep.mubr.bf16.mxu0 0
        %2755 = vmatmul.mubr.bf16.gmra.mrb[0].mxu0 %v2615
        %v2756 = vpop.f32.mrb[0].mxu0
        %v2757 = vadd.f32 %v2552, %v2756
        %v2758 = vpop.f32.mrb[0].mxu0
        %v2759 = vpop.f32.mrb[0].mxu0
        %v2760 = vadd.f32 %v2552, %v2759
        %v2761 = vpop.f32.mrb[0].mxu0
        %2762 = vmatprep.mubr.bf16.mxu0 0
        %2763 = vmatmul.mubr.bf16.gmra.mrb[0].mxu0 %v2618
        %v2764 = vpop.f32.mrb[0].mxu0
        %v2765 = vadd.f32 %v2552, %v2764
        %v2766 = vpop.f32.mrb[0].mxu0
        %v2767 = vpop.f32.mrb[0].mxu0
        %v2768 = vadd.f32 %v2552, %v2767
        %v2769 = vpop.f32.mrb[0].mxu0
        %2770 = vmatprep.mubr.bf16.mxu0 0
        %2771 = vmatmul.mubr.bf16.gmra.mrb[0].mxu0 %v2621
        %v2772 = vpop.f32.mrb[0].mxu0
        %v2773 = vadd.f32 %v2552, %v2772
        %v2774 = vpop.f32.mrb[0].mxu0
        %v2775 = vpop.f32.mrb[0].mxu0
        %v2776 = vadd.f32 %v2552, %v2775
        %v2777 = vpop.f32.mrb[0].mxu0
        %2778 = vmatprep.mubr.bf16.mxu0 0
        %2779 = vmatmul.mubr.bf16.gmra.mrb[0].mxu0 %v2624
        %v2780 = vpop.f32.mrb[0].mxu0
        %v2781 = vadd.f32 %v2552, %v2780
        %v2782 = vpop.f32.mrb[0].mxu0
        %v2783 = vpop.f32.mrb[0].mxu0
        %v2784 = vadd.f32 %v2552, %v2783
        %v2785 = vpop.f32.mrb[0].mxu0
        %2786 = vdwg.mxu0
        %2787 = vst [vmem:[%s566] sm:$0xff] %v2661
        %2788 = vst [vmem:[%s566 + $0x8] sm:$0xff] %v2664
        %2789 = vst [vmem:[%s566 + $0x10] sm:$0xff] %v2669
        %2790 = vst [vmem:[%s566 + $0x18] sm:$0xff] %v2672
        %2791 = vst [vmem:[%s566 + $0x20] sm:$0xff] %v2677
        %2792 = vst [vmem:[%s566 + $0x28] sm:$0xff] %v2680
        %2793 = vst [vmem:[%s566 + $0x30] sm:$0xff] %v2685
        %2794 = vst [vmem:[%s566 + $0x38] sm:$0xff] %v2688
        %2795 = vst [vmem:[%s566 + $0x40] sm:$0xff] %v2693
        %2796 = vst [vmem:[%s566 + $0x48] sm:$0xff] %v2696
        %2797 = vst [vmem:[%s566 + $0x50] sm:$0xff] %v2701
        %2798 = vst [vmem:[%s566 + $0x58] sm:$0xff] %v2704
        %2799 = vst [vmem:[%s566 + $0x60] sm:$0xff] %v2709
        %2800 = vst [vmem:[%s566 + $0x68] sm:$0xff] %v2712
        %2801 = vst [vmem:[%s566 + $0x70] sm:$0xff] %v2717
        %2802 = vst [vmem:[%s566 + $0x78] sm:$0xff] %v2720
        %2803 = vst [vmem:[%s566 + $0x80] sm:$0xff] %v2725
        %2804 = vst [vmem:[%s566 + $0x88] sm:$0xff] %v2728
        %2805 = vst [vmem:[%s566 + $0x90] sm:$0xff] %v2733
        %2806 = vst [vmem:[%s566 + $0x98] sm:$0xff] %v2736
        %2807 = vst [vmem:[%s566 + $0xa0] sm:$0xff] %v2741
        %2808 = vst [vmem:[%s566 + $0xa8] sm:$0xff] %v2744
        %2809 = vst [vmem:[%s566 + $0xb0] sm:$0xff] %v2749
        %2810 = vst [vmem:[%s566 + $0xb8] sm:$0xff] %v2752
        %2811 = vst [vmem:[%s566 + $0xc0] sm:$0xff] %v2757
        %2812 = vst [vmem:[%s566 + $0xc8] sm:$0xff] %v2760
        %2813 = vst [vmem:[%s566 + $0xd0] sm:$0xff] %v2765
        %2814 = vst [vmem:[%s566 + $0xd8] sm:$0xff] %v2768
        %2815 = vst [vmem:[%s566 + $0xe0] sm:$0xff] %v2773
        %2816 = vst [vmem:[%s566 + $0xe8] sm:$0xff] %v2776
        %2817 = vst [vmem:[%s566 + $0xf0] sm:$0xff] %v2781
        %2818 = vst [vmem:[%s566 + $0xf8] sm:$0xff] %v2784
        %s2819 = sand.u32 %s404, 1
        %s2820 = scalar_lea.sflag [#allocation4], %s2819
        %s2821 = sand.u32 %s404, 1
        %s2822 = smul.addr %s2821, 256
        %s2823 = scalar_lea.vmem [#allocation5], %s2822
        // Predicated region
        $region93: #{tpu_custom_call.1} parent=87 // pred_check
          %p2824 = pneg %p414
        $region94: #{tpu_custom_call.1} parent=87 // pred_check_branch
          %2826 = sbr.rel (%p2824) target = $region96
        $region95: #{tpu_custom_call.1} parent=87 // pred_region
          %s2827 = smul.u32 32, %s34
          %s2829 = ssub.s32 4096, 4096
          %2830 = vsyncadd %s2820, %s2829
          %s2831 = smul.addr %s2827, 128
          %s2832 = scalar_lea.hbm %s17, %s2831
          %s2833 = sshll.u32 %s2823, 4
          %s2834 = int_to_ptr.vmem [resolvable:$true] %s2833
          %2839 = dma.vmem_to_hbm [thread:$0]  %s2834, 4096, %s2832, %s2820, 128, 128, 8
        $region96: #{tpu_custom_call.1} parent=87 // pred_fallthru
          _
      $region88: #{tpu_custom_call.1} parent=5 // pred_fallthru
        _
      %p2840 = scmp.le.s32.totalorder 2, %s29
      // Predicated region
      $region97: #{tpu_custom_call.1} parent=5 // pred_check
        %p2841 = pneg %p2840
      $region98: #{tpu_custom_call.1} parent=5 // pred_check_branch
        %2843 = sbr.rel (%p2841) target = $region100
      $region99: #{tpu_custom_call.1} parent=5 // pred_region
        %s2844 = ssub.s32 %s29, 2
        // Predicated region
        $region101: #{tpu_custom_call.1} parent=99 // pred_check
          %p2845 = pneg %p420
        $region102: #{tpu_custom_call.1} parent=99 // pred_check_branch
          %2847 = sbr.rel (%p2845) target = $region104
        $region103: #{tpu_custom_call.1} parent=99 // pred_region
          %s2848 = sand.u32 %s405, 1
          %s2849 = scalar_lea.sflag [#allocation4], %s2848
          %s2850 = sand.u32 %s405, 1
          %s2851 = smul.addr %s2850, 256
          %s2852 = scalar_lea.vmem [#allocation5], %s2851
          %2853 = dma.done %s2849, 4096
        $region104: #{tpu_custom_call.1} parent=99 // pred_fallthru
          _
      $region100: #{tpu_custom_call.1} parent=5 // pred_fallthru
        _
    $region6: #{tpu_custom_call.1} parent=1 // loop_footer
      %s33 = sadd.s32 1, %s29
    $region7: #{tpu_custom_call.1} parent=1 // loop_footer_branch
      %28 = sbr.rel target = $region3
    $region8: #{tpu_custom_call.1} parent=1 // loop_exit
      _
    %2854 = vsyncpa [#allocation3], 1
    %s2855 = scalar_lea.sflag [#allocation3], 1
    %2856 = vsyncpa %s2855, 1
    %2857 = vsyncpa [#allocation4], 1
    %s2858 = scalar_lea.sflag [#allocation4], 1
    %2859 = vsyncpa %s2858, 1

</llo_original>
